<compile_context>
chip_gen: v7x
topology: tpu7x:2x2x1
jax: 0.10.0
libtpu: 0.0.40
codegen_flags: <defaults>
</compile_context>

<pallas_src>
import functools

import jax
import jax.numpy as jnp
from jax import lax
from jax.experimental import pallas as pl
from jax.experimental.pallas import tpu as pltpu

_LN_EPS = 1e-5                     # PyTorch nn.LayerNorm default
_VMEM_LIMIT = 48 * 1024 * 1024     # safe on v7x (64 MiB physical), > default scope on v5e/v6e


def _round_up(x, m):
    return ((x + m - 1) // m) * m


def _pick_row_tile(m, target=512):
    # Row tile for the projection kernels: multiple of 8, capped at `target`.
    return min(target, _round_up(m, 8))


def _pick_seq_tile(n, target):
    # Sequence tile (multiple of 8).  Prefer a divisor of n; otherwise return the
    # target and let the caller pad (and mask, on the kv axis).
    if n <= target:
        return _round_up(n, 8)
    for t in range(target, 7, -8):
        if n % t == 0:
            return t
    return target


# --------------------------------------------------------------------------- #
# Kernel 1: fused LayerNorm + Linear   (q / k / v projections)
# --------------------------------------------------------------------------- #
def _ln_linear_kernel(x_ref, g_ref, b_ref, w_ref, bias_ref, o_ref, *, eps):
    x = x_ref[...].astype(jnp.float32)
    mean = jnp.mean(x, axis=-1, keepdims=True)
    xc = x - mean
    var = jnp.mean(xc * xc, axis=-1, keepdims=True)
    y = xc * lax.rsqrt(var + eps)
    y = y * g_ref[...].astype(jnp.float32) + b_ref[...].astype(jnp.float32)
    # Feed the MXU in the weight's native dtype; accumulate in f32.
    acc = jnp.dot(y.astype(w_ref.dtype), w_ref[...],
                  preferred_element_type=jnp.float32)
    o_ref[...] = (acc + bias_ref[...].astype(jnp.float32)).astype(o_ref.dtype)


def _ln_linear(x2d, gamma, beta, w, bias, *, tile_m=512):
    m, d = x2d.shape
    e = w.shape[1]
    tm = _pick_row_tile(m, tile_m)
    mp = _round_up(m, tm)
    if mp != m:
        x2d = jnp.pad(x2d, ((0, mp - m), (0, 0)))
    out = pl.pallas_call(
        functools.partial(_ln_linear_kernel, eps=_LN_EPS),
        out_shape=jax.ShapeDtypeStruct((mp, e), x2d.dtype),
        grid=(mp // tm,),
        in_specs=[
            pl.BlockSpec((tm, d), lambda i: (i, 0)),
            pl.BlockSpec((1, d), lambda i: (0, 0)),
            pl.BlockSpec((1, d), lambda i: (0, 0)),
            pl.BlockSpec((d, e), lambda i: (0, 0)),   # weight: VMEM-resident
            pl.BlockSpec((1, e), lambda i: (0, 0)),
        ],
        out_specs=pl.BlockSpec((tm, e), lambda i: (i, 0)),
        compiler_params=pltpu.CompilerParams(
            dimension_semantics=("parallel",),
            vmem_limit_bytes=_VMEM_LIMIT),
        cost_estimate=pl.CostEstimate(
            flops=2 * mp * d * e + 10 * mp * d,
            transcendentals=mp,
            bytes_accessed=x2d.dtype.itemsize * (mp * d + mp * e)
                           + w.dtype.itemsize * d * e),
    )(x2d, gamma.reshape(1, d), beta.reshape(1, d), w, bias.reshape(1, e))
    return out[:m]


# --------------------------------------------------------------------------- #
# Kernel 2: plain Linear + bias   (output projection)
# --------------------------------------------------------------------------- #
def _linear_kernel(x_ref, w_ref, b_ref, o_ref):
    acc = jnp.dot(x_ref[...], w_ref[...], preferred_element_type=jnp.float32)
    o_ref[...] = (acc + b_ref[...].astype(jnp.float32)).astype(o_ref.dtype)


def _linear(x2d, w, bias, *, tile_m=512):
    m, d = x2d.shape
    e = w.shape[1]
    tm = _pick_row_tile(m, tile_m)
    mp = _round_up(m, tm)
    if mp != m:
        x2d = jnp.pad(x2d, ((0, mp - m), (0, 0)))
    out = pl.pallas_call(
        _linear_kernel,
        out_shape=jax.ShapeDtypeStruct((mp, e), x2d.dtype),
        grid=(mp // tm,),
        in_specs=[
            pl.BlockSpec((tm, d), lambda i: (i, 0)),
            pl.BlockSpec((d, e), lambda i: (0, 0)),
            pl.BlockSpec((1, e), lambda i: (0, 0)),
        ],
        out_specs=pl.BlockSpec((tm, e), lambda i: (i, 0)),
        compiler_params=pltpu.CompilerParams(
            dimension_semantics=("parallel",),
            vmem_limit_bytes=_VMEM_LIMIT),
        cost_estimate=pl.CostEstimate(
            flops=2 * mp * d * e, transcendentals=0,
            bytes_accessed=x2d.dtype.itemsize * (mp * d + mp * e)
                           + w.dtype.itemsize * d * e),
    )(x2d, w, bias.reshape(1, e))
    return out[:m]


# --------------------------------------------------------------------------- #
# Kernel 3: multi-head attention with online softmax.
# Kernel body sees 2-D tiles: q (TQ, c), k/v (TK, c), out (TQ, c); both layout
# paths (transpose-free and transposed) squeeze their leading grid dims.
# --------------------------------------------------------------------------- #
def _mha_kernel(q_ref, k_ref, v_ref, o_ref, m_sc, l_sc, acc_sc, *,
                scale, kv_len, tile_k, mask_kv):
    ki = pl.program_id(3)

    @pl.when(ki == 0)
    def _():
        m_sc[...] = jnp.full(m_sc.shape, -jnp.inf, jnp.float32)
        l_sc[...] = jnp.zeros(l_sc.shape, jnp.float32)
        acc_sc[...] = jnp.zeros(acc_sc.shape, jnp.float32)

    # Scale folded into the (small) q tile; operands stay in their native dtype
    # (bf16 stays bf16), MXU accumulates in f32 via preferred_element_type.
    q = q_ref[...] * scale                                   # (TQ, c)
    k = k_ref[...]                                           # (TK, c)
    s = lax.dot_general(q, k, (((1,), (1,)), ((), ())),
                        preferred_element_type=jnp.float32)  # (TQ, TK) f32

    if mask_kv:  # static: only emitted when the kv axis was padded
        col = ki * tile_k + lax.broadcasted_iota(jnp.int32, s.shape, 1)
        s = jnp.where(col < kv_len, s, -jnp.inf)

    # m/l scratch is lane-dense (TQ, 128); per-row values recovered with a cheap
    # XLU lane-reduce (all lanes hold the same value).
    m_prev = jnp.max(m_sc[...], axis=-1, keepdims=True)      # (TQ, 1)
    s_max = jnp.max(s, axis=-1, keepdims=True)               # (TQ, 1)
    m_next = jnp.maximum(m_prev, s_max)                      # (TQ, 1)
    alpha = jnp.exp(m_prev - m_next)                         # (TQ, 1)
    p = jnp.exp(s - m_next)                                  # (TQ, TK) f32
    l_sc[...] = alpha * l_sc[...] + jnp.sum(p, axis=-1, keepdims=True)
    acc_sc[...] = alpha * acc_sc[...] + jnp.dot(
        p.astype(v_ref.dtype), v_ref[...], preferred_element_type=jnp.float32)
    m_sc[...] = jnp.broadcast_to(m_next, m_sc.shape)         # lane-dense store

    @pl.when(ki == pl.num_programs(3) - 1)
    def _():
        l_row = jnp.max(l_sc[...], axis=-1, keepdims=True)   # (TQ, 1)
        o_ref[...] = (acc_sc[...] * pl.reciprocal(l_row, approx=True)
                      ).astype(o_ref.dtype)


def _mha(qp, kp, vp, b, nq, nk, num_heads, scale, *, tile_q=512, tile_k=512):
    """qp/kp/vp: (b*n, d) projected activations in (g c)-packed layout.
    Returns the attention output as (b*nq, d)."""
    d = qp.shape[-1]
    c = d // num_heads
    tq = _pick_seq_tile(nq, tile_q)
    tk = _pick_seq_tile(nk, tile_k)
    nq_p = _round_up(nq, tq)
    nk_p = _round_up(nk, tk)
    mask_kv = nk_p != nk

    kernel = functools.partial(_mha_kernel, scale=scale, kv_len=nk,
                               tile_k=tk, mask_kv=mask_kv)
    grid = (b, num_heads, nq_p // tq, nk_p // tk)
    dims = ("parallel", "parallel", "parallel", "arbitrary")
    scratch = [pltpu.VMEM((tq, 128), jnp.float32),   # running max   (lane-broadcast)
               pltpu.VMEM((tq, 128), jnp.float32),   # running denom (lane-broadcast)
               pltpu.VMEM((tq, c), jnp.float32)]     # running numerator
    cost = pl.CostEstimate(
        flops=4 * b * num_heads * nq_p * nk_p * c,
        transcendentals=b * num_heads * nq_p * nk_p,
        bytes_accessed=qp.dtype.itemsize * b * (2 * nq_p + 2 * nk_p) * d)
    cparams = pltpu.CompilerParams(dimension_semantics=dims,
                                   vmem_limit_bytes=_VMEM_LIMIT)

    if c % 128 == 0 or num_heads == 1:
        # Layout-preserving path: no (b,n,g,c)<->(b,g,n,c) transposes; the head is
        # sliced out of the packed (g*c) last axis by the BlockSpec (lane rule ok).
        q3 = qp.reshape(b, nq, d)
        k3 = kp.reshape(b, nk, d)
        v3 = vp.reshape(b, nk, d)
        if nq_p != nq:
            q3 = jnp.pad(q3, ((0, 0), (0, nq_p - nq), (0, 0)))
        if nk_p != nk:
            k3 = jnp.pad(k3, ((0, 0), (0, nk_p - nk), (0, 0)))
            v3 = jnp.pad(v3, ((0, 0), (0, nk_p - nk), (0, 0)))
        out = pl.pallas_call(
            kernel,
            out_shape=jax.ShapeDtypeStruct((b, nq_p, d), qp.dtype),
            grid=grid,
            in_specs=[
                pl.BlockSpec((None, tq, c), lambda bi, gi, qi, ki: (bi, qi, gi)),
                pl.BlockSpec((None, tk, c), lambda bi, gi, qi, ki: (bi, ki, gi)),
                pl.BlockSpec((None, tk, c), lambda bi, gi, qi, ki: (bi, ki, gi)),
            ],
            out_specs=pl.BlockSpec((None, tq, c),
                                   lambda bi, gi, qi, ki: (bi, qi, gi)),
            scratch_shapes=scratch,
            compiler_params=cparams,
            cost_estimate=cost,
        )(q3, k3, v3)
        return out[:, :nq, :].reshape(b * nq, d)

    # Fallback for head_dim not a multiple of 128: transpose so the head dim sits
    # alone on the lane axis (block last dim == full array last dim).
    qh = qp.reshape(b, nq, num_heads, c).transpose(0, 2, 1, 3)
    kh = kp.reshape(b, nk, num_heads, c).transpose(0, 2, 1, 3)
    vh = vp.reshape(b, nk, num_heads, c).transpose(0, 2, 1, 3)
    if nq_p != nq:
        qh = jnp.pad(qh, ((0, 0), (0, 0), (0, nq_p - nq), (0, 0)))
    if nk_p != nk:
        kh = jnp.pad(kh, ((0, 0), (0, 0), (0, nk_p - nk), (0, 0)))
        vh = jnp.pad(vh, ((0, 0), (0, 0), (0, nk_p - nk), (0, 0)))
    out = pl.pallas_call(
        kernel,
        out_shape=jax.ShapeDtypeStruct((b, num_heads, nq_p, c), qp.dtype),
        grid=grid,
        in_specs=[
            pl.BlockSpec((None, None, tq, c), lambda bi, gi, qi, ki: (bi, gi, qi, 0)),
            pl.BlockSpec((None, None, tk, c), lambda bi, gi, qi, ki: (bi, gi, ki, 0)),
            pl.BlockSpec((None, None, tk, c), lambda bi, gi, qi, ki: (bi, gi, ki, 0)),
        ],
        out_specs=pl.BlockSpec((None, None, tq, c),
                               lambda bi, gi, qi, ki: (bi, gi, qi, 0)),
        scratch_shapes=scratch,
        compiler_params=cparams,
        cost_estimate=cost,
    )(qh, kh, vh)
    return out[:, :, :nq, :].transpose(0, 2, 1, 3).reshape(b * nq, d)


# --------------------------------------------------------------------------- #
# Module forward
# --------------------------------------------------------------------------- #
def _apply_pos(x, pos):
    if pos is None:
        return x
    if pos.ndim != x.ndim:   # (b, n, g, c) pos added to (b, n, g*c) tensor
        pos = pos.reshape(pos.shape[:-2] + (pos.shape[-2] * pos.shape[-1],))
    return x + pos


@functools.partial(jax.jit,
                   static_argnames=("num_heads", "tile_q", "tile_k", "tile_m"))
def any_attention_forward(params, q, k, v, qpos, kpos, num_heads,
                          tile_q=512, tile_k=512, tile_m=512):
    # TODO(synk): `mask` and `rel_pos` branches of the PyTorch forward are not
    # implemented (both default to None; rel_pos is an opaque callable hook).
    b, nq, d = q.shape
    nk = k.shape[1]
    scale = float(d / num_heads) ** -0.5

    q = _apply_pos(q, qpos)
    k = _apply_pos(k, kpos)

    qp = _ln_linear(q.reshape(b * nq, d), params["norm_q_w"], params["norm_q_b"],
                    params["wq"], params["bq"], tile_m=tile_m)
    kp = _ln_linear(k.reshape(b * nk, d), params["norm_k_w"], params["norm_k_b"],
                    params["wk"], params["bk"], tile_m=tile_m)
    vp = _ln_linear(v.reshape(b * nk, d), params["norm_v_w"], params["norm_v_b"],
                    params["wv"], params["bv"], tile_m=tile_m)

    out = _mha(qp, kp, vp, b, nq, nk, num_heads, scale,
               tile_q=tile_q, tile_k=tile_k)           # (b*nq, d)

    out = _linear(out, params["wp"], params["bp"], tile_m=tile_m)
    return out.reshape(b, nq, d)


# --------------------------------------------------------------------------- #
# Pure-JAX reference (mirrors the PyTorch module)
# --------------------------------------------------------------------------- #
def _reference_forward(params, q, k, v, qpos, kpos, num_heads):
    def layernorm(x, w, bb):
        mu = jnp.mean(x, axis=-1, keepdims=True)
        var = jnp.mean((x - mu) ** 2, axis=-1, keepdims=True)
        return (x - mu) / jnp.sqrt(var + _LN_EPS) * w + bb

    q = _apply_pos(q, qpos)
    k = _apply_pos(k, kpos)
    q = layernorm(q, params["norm_q_w"], params["norm_q_b"]) @ params["wq"] + params["bq"]
    k = layernorm(k, params["norm_k_w"], params["norm_k_b"]) @ params["wk"] + params["bk"]
    v = layernorm(v, params["norm_v_w"], params["norm_v_b"]) @ params["wv"] + params["bv"]

    b, nq, d = q.shape
    nk = k.shape[1]
    g = num_heads
    c = d // g
    qh = q.reshape(b, nq, g, c)
    kh = k.reshape(b, nk, g, c)
    vh = v.reshape(b, nk, g, c)
    attn = jnp.einsum("bqgc,bkgc->bqgk", qh, kh) * (float(d / g) ** -0.5)
    attn = jax.nn.softmax(attn, axis=-1)
    out = jnp.einsum("bqgk,bkgc->bqgc", attn, vh).reshape(b, nq, d)
    return out @ params["wp"] + params["bp"]


def _make_case(key, b, nq, nk, dim, heads):
    keys = jax.random.split(key, 16)
    bound = 1.0 / (dim ** 0.5)
    c = dim // heads
    q = jax.random.normal(keys[0], (b, nq, dim), jnp.float32)
    k = jax.random.normal(keys[1], (b, nk, dim), jnp.float32)
    v = jax.random.normal(keys[2], (b, nk, dim), jnp.float32)
    qpos = 0.5 * jax.random.normal(keys[3], (b, nq, heads, c), jnp.float32)  # rank-4 path
    kpos = 0.5 * jax.random.normal(keys[4], (b, nk, dim), jnp.float32)       # same-rank path
    params = {
        "norm_q_w": 1.0 + 0.1 * jax.random.normal(keys[5], (dim,), jnp.float32),
        "norm_q_b": 0.1 * jax.random.normal(keys[6], (dim,), jnp.float32),
        "norm_k_w": 1.0 + 0.1 * jax.random.normal(keys[7], (dim,), jnp.float32),
        "norm_k_b": 0.1 * jax.random.normal(keys[8], (dim,), jnp.float32),
        "norm_v_w": 1.0 + 0.1 * jax.random.normal(keys[9], (dim,), jnp.float32),
        "norm_v_b": 0.1 * jax.random.normal(keys[10], (dim,), jnp.float32),
        "wq": jax.random.uniform(keys[11], (dim, dim), jnp.float32, -bound, bound),
        "wk": jax.random.uniform(keys[12], (dim, dim), jnp.float32, -bound, bound),
        "wv": jax.random.uniform(keys[13], (dim, dim), jnp.float32, -bound, bound),
        "wp": jax.random.uniform(keys[14], (dim, dim), jnp.float32, -bound, bound),
        "bq": jnp.zeros((dim,), jnp.float32),   # qkv_bias=False
        "bk": jnp.zeros((dim,), jnp.float32),
        "bv": jnp.zeros((dim,), jnp.float32),
        "bp": jax.random.uniform(keys[15], (dim,), jnp.float32, -bound, bound),
    }
    return params, q, k, v, qpos, kpos


if __name__ == "__main__":
    # case 1: small dims (head_dim=8) -> transposed-layout fallback path.
    # case 2: head_dim=128 -> layout-preserving (no-transpose) path, plus q/kv
    #         padding + key masking and a multi-step kv accumulation loop.
    cases = [
        # (b, nq, nk, dim, heads, tile_q, tile_k)
        (2, 8, 16, 32, 4, 512, 512),
        (1, 12, 20, 256, 2, 8, 8),
    ]
    key = jax.random.PRNGKey(0)
    for idx, (b, nq, nk, dim, heads, tq, tk) in enumerate(cases):
        key, sub = jax.random.split(key)
        params, q, k, v, qpos, kpos = _make_case(sub, b, nq, nk, dim, heads)
        out = any_attention_forward(params, q, k, v, qpos, kpos,
                                    num_heads=heads, tile_q=tq, tile_k=tk)
        out = jax.block_until_ready(out)
        ref = _reference_forward(params, q, k, v, qpos, kpos, heads)
        assert out.shape == ref.shape == (b, nq, dim)
        err = float(jnp.max(jnp.abs(out - ref)))
        assert jnp.allclose(out, ref, atol=2e-3, rtol=2e-3), (
            "case %d: max abs err = %g" % (idx, err))
    print("KERNEL_OK")
</pallas_src>

<mosaic_0001>
module attributes {stable_mosaic.version = 11 : i64} {
  func.func @_ln_linear_kernel(%arg0: i32, %arg1: memref<32x32xf32, #tpu.memory_space<vmem>>, %arg2: memref<1x32xf32, #tpu.memory_space<vmem>>, %arg3: memref<1x32xf32, #tpu.memory_space<vmem>>, %arg4: memref<32x32xf32, #tpu.memory_space<vmem>>, %arg5: memref<1x32xf32, #tpu.memory_space<vmem>>, %arg6: memref<32x32xf32, #tpu.memory_space<vmem>>) attributes {dimension_semantics = [#tpu.dimension_semantics<parallel>], iteration_bounds = array<i64: 1>, scalar_prefetch = 0 : i64, scratch_operands = 0 : i64, tpu.core_type = #tpu.core_type<tc>, window_params = [{transform_indices = @transform_0, window_bounds = array<i64: 32, 32>}, {pipeline_mode = #tpu.pipeline_mode<synchronous>, transform_indices = @transform_1, window_bounds = array<i64: 1, 32>}, {pipeline_mode = #tpu.pipeline_mode<synchronous>, transform_indices = @transform_2, window_bounds = array<i64: 1, 32>}, {pipeline_mode = #tpu.pipeline_mode<synchronous>, transform_indices = @transform_3, window_bounds = array<i64: 32, 32>}, {pipeline_mode = #tpu.pipeline_mode<synchronous>, transform_indices = @transform_4, window_bounds = array<i64: 1, 32>}, {transform_indices = @transform_5, window_bounds = array<i64: 32, 32>}]} {
    %c0 = arith.constant 0 : index
    %c0_0 = arith.constant 0 : index
    %0 = vector.load %arg1[%c0, %c0_0] : memref<32x32xf32, #tpu.memory_space<vmem>>, vector<32x32xf32>
    %cst = arith.constant dense<0.000000e+00> : vector<32xf32>
    %1 = vector.multi_reduction <add>, %0, %cst [1] : vector<32x32xf32> to vector<32xf32>
    %2 = vector.shape_cast %1 : vector<32xf32> to vector<32x1xf32>
    %cst_1 = arith.constant 3.200000e+01 : f32
    %3 = vector.broadcast %cst_1 : f32 to vector<32x1xf32>
    %4 = arith.divf %2, %3 : vector<32x1xf32>
    %5 = vector.broadcast %4 : vector<32x1xf32> to vector<32x32xf32>
    %6 = arith.subf %0, %5 : vector<32x32xf32>
    %7 = arith.mulf %6, %6 : vector<32x32xf32>
    %cst_2 = arith.constant dense<0.000000e+00> : vector<32xf32>
    %8 = vector.multi_reduction <add>, %7, %cst_2 [1] : vector<32x32xf32> to vector<32xf32>
    %9 = vector.shape_cast %8 : vector<32xf32> to vector<32x1xf32>
    %cst_3 = arith.constant 3.200000e+01 : f32
    %10 = vector.broadcast %cst_3 : f32 to vector<32x1xf32>
    %11 = arith.divf %9, %10 : vector<32x1xf32>
    %cst_4 = arith.constant 9.99999974E-6 : f32
    %12 = vector.broadcast %cst_4 : f32 to vector<32x1xf32>
    %13 = arith.addf %11, %12 : vector<32x1xf32>
    %14 = math.rsqrt %13 : vector<32x1xf32>
    %15 = vector.broadcast %14 : vector<32x1xf32> to vector<32x32xf32>
    %16 = arith.mulf %6, %15 : vector<32x32xf32>
    %c0_5 = arith.constant 0 : index
    %c0_6 = arith.constant 0 : index
    %17 = vector.load %arg2[%c0_5, %c0_6] : memref<1x32xf32, #tpu.memory_space<vmem>>, vector<1x32xf32>
    %18 = vector.broadcast %17 : vector<1x32xf32> to vector<32x32xf32>
    %19 = arith.mulf %16, %18 : vector<32x32xf32>
    %c0_7 = arith.constant 0 : index
    %c0_8 = arith.constant 0 : index
    %20 = vector.load %arg3[%c0_7, %c0_8] : memref<1x32xf32, #tpu.memory_space<vmem>>, vector<1x32xf32>
    %21 = vector.broadcast %20 : vector<1x32xf32> to vector<32x32xf32>
    %22 = arith.addf %19, %21 : vector<32x32xf32>
    %c0_9 = arith.constant 0 : index
    %c0_10 = arith.constant 0 : index
    %23 = vector.load %arg4[%c0_9, %c0_10] : memref<32x32xf32, #tpu.memory_space<vmem>>, vector<32x32xf32>
    %cst_11 = arith.constant dense<0.000000e+00> : vector<32x32xf32>
    %24 = tpu.matmul %22, %23, %cst_11 {dimension_numbers = #tpu.dot_dimension_numbers<[1], [0], [0], [1], [0, 0, 1, 1], [], []>} : vector<32x32xf32>, vector<32x32xf32>, vector<32x32xf32> -> vector<32x32xf32>
    %c0_12 = arith.constant 0 : index
    %c0_13 = arith.constant 0 : index
    %25 = vector.load %arg5[%c0_12, %c0_13] : memref<1x32xf32, #tpu.memory_space<vmem>>, vector<1x32xf32>
    %26 = vector.broadcast %25 : vector<1x32xf32> to vector<32x32xf32>
    %27 = arith.addf %24, %26 : vector<32x32xf32>
    %c0_14 = arith.constant 0 : index
    %c0_15 = arith.constant 0 : index
    %28 = vector.load %arg6[%c0_14, %c0_15] : memref<32x32xf32, #tpu.memory_space<vmem>>, vector<32x32xf32>
    tpu.vector_store %arg6[%c0_14, %c0_15], %27 {strides = array<i32>} : memref<32x32xf32, #tpu.memory_space<vmem>>, vector<32x32xf32>,
    return
  }
  func.func @transform_0(%arg0: i32) -> (i32, i32) {
    %c0_i32 = arith.constant 0 : i32
    %c0_i32_0 = arith.constant 0 : i32
    return %arg0, %c0_i32 : i32, i32
  }
  func.func @transform_1(%arg0: i32) -> (i32, i32) {
    %c0_i32 = arith.constant 0 : i32
    %c0_i32_0 = arith.constant 0 : i32
    %c0_i32_1 = arith.constant 0 : i32
    return %c0_i32, %c0_i32_0 : i32, i32
  }
  func.func @transform_2(%arg0: i32) -> (i32, i32) {
    %c0_i32 = arith.constant 0 : i32
    %c0_i32_0 = arith.constant 0 : i32
    %c0_i32_1 = arith.constant 0 : i32
    return %c0_i32, %c0_i32_0 : i32, i32
  }
  func.func @transform_3(%arg0: i32) -> (i32, i32) {
    %c0_i32 = arith.constant 0 : i32
    %c0_i32_0 = arith.constant 0 : i32
    %c0_i32_1 = arith.constant 0 : i32
    return %c0_i32, %c0_i32_0 : i32, i32
  }
  func.func @transform_4(%arg0: i32) -> (i32, i32) {
    %c0_i32 = arith.constant 0 : i32
    %c0_i32_0 = arith.constant 0 : i32
    %c0_i32_1 = arith.constant 0 : i32
    return %c0_i32, %c0_i32_0 : i32, i32
  }
  func.func @transform_5(%arg0: i32) -> (i32, i32) {
    %c0_i32 = arith.constant 0 : i32
    %c0_i32_0 = arith.constant 0 : i32
    return %arg0, %c0_i32 : i32, i32
  }
}

module attributes {stable_mosaic.version = 11 : i64} {
  func.func @_ln_linear_kernel(%arg0: i32, %arg1: memref<16x32xf32, #tpu.memory_space<vmem>>, %arg2: memref<1x32xf32, #tpu.memory_space<vmem>>, %arg3: memref<1x32xf32, #tpu.memory_space<vmem>>, %arg4: memref<32x32xf32, #tpu.memory_space<vmem>>, %arg5: memref<1x32xf32, #tpu.memory_space<vmem>>, %arg6: memref<16x32xf32, #tpu.memory_space<vmem>>) attributes {dimension_semantics = [#tpu.dimension_semantics<parallel>], iteration_bounds = array<i64: 1>, scalar_prefetch = 0 : i64, scratch_operands = 0 : i64, tpu.core_type = #tpu.core_type<tc>, window_params = [{transform_indices = @transform_0, window_bounds = array<i64: 16, 32>}, {pipeline_mode = #tpu.pipeline_mode<synchronous>, transform_indices = @transform_1, window_bounds = array<i64: 1, 32>}, {pipeline_mode = #tpu.pipeline_mode<synchronous>, transform_indices = @transform_2, window_bounds = array<i64: 1, 32>}, {pipeline_mode = #tpu.pipeline_mode<synchronous>, transform_indices = @transform_3, window_bounds = array<i64: 32, 32>}, {pipeline_mode = #tpu.pipeline_mode<synchronous>, transform_indices = @transform_4, window_bounds = array<i64: 1, 32>}, {transform_indices = @transform_5, window_bounds = array<i64: 16, 32>}]} {
    %c0 = arith.constant 0 : index
    %c0_0 = arith.constant 0 : index
    %0 = vector.load %arg1[%c0, %c0_0] : memref<16x32xf32, #tpu.memory_space<vmem>>, vector<16x32xf32>
    %cst = arith.constant dense<0.000000e+00> : vector<16xf32>
    %1 = vector.multi_reduction <add>, %0, %cst [1] : vector<16x32xf32> to vector<16xf32>
    %2 = vector.shape_cast %1 : vector<16xf32> to vector<16x1xf32>
    %cst_1 = arith.constant 3.200000e+01 : f32
    %3 = vector.broadcast %cst_1 : f32 to vector<16x1xf32>
    %4 = arith.divf %2, %3 : vector<16x1xf32>
    %5 = vector.broadcast %4 : vector<16x1xf32> to vector<16x32xf32>
    %6 = arith.subf %0, %5 : vector<16x32xf32>
    %7 = arith.mulf %6, %6 : vector<16x32xf32>
    %cst_2 = arith.constant dense<0.000000e+00> : vector<16xf32>
    %8 = vector.multi_reduction <add>, %7, %cst_2 [1] : vector<16x32xf32> to vector<16xf32>
    %9 = vector.shape_cast %8 : vector<16xf32> to vector<16x1xf32>
    %cst_3 = arith.constant 3.200000e+01 : f32
    %10 = vector.broadcast %cst_3 : f32 to vector<16x1xf32>
    %11 = arith.divf %9, %10 : vector<16x1xf32>
    %cst_4 = arith.constant 9.99999974E-6 : f32
    %12 = vector.broadcast %cst_4 : f32 to vector<16x1xf32>
    %13 = arith.addf %11, %12 : vector<16x1xf32>
    %14 = math.rsqrt %13 : vector<16x1xf32>
    %15 = vector.broadcast %14 : vector<16x1xf32> to vector<16x32xf32>
    %16 = arith.mulf %6, %15 : vector<16x32xf32>
    %c0_5 = arith.constant 0 : index
    %c0_6 = arith.constant 0 : index
    %17 = vector.load %arg2[%c0_5, %c0_6] : memref<1x32xf32, #tpu.memory_space<vmem>>, vector<1x32xf32>
    %18 = vector.broadcast %17 : vector<1x32xf32> to vector<16x32xf32>
    %19 = arith.mulf %16, %18 : vector<16x32xf32>
    %c0_7 = arith.constant 0 : index
    %c0_8 = arith.constant 0 : index
    %20 = vector.load %arg3[%c0_7, %c0_8] : memref<1x32xf32, #tpu.memory_space<vmem>>, vector<1x32xf32>
    %21 = vector.broadcast %20 : vector<1x32xf32> to vector<16x32xf32>
    %22 = arith.addf %19, %21 : vector<16x32xf32>
    %c0_9 = arith.constant 0 : index
    %c0_10 = arith.constant 0 : index
    %23 = vector.load %arg4[%c0_9, %c0_10] : memref<32x32xf32, #tpu.memory_space<vmem>>, vector<32x32xf32>
    %cst_11 = arith.constant dense<0.000000e+00> : vector<16x32xf32>
    %24 = tpu.matmul %22, %23, %cst_11 {dimension_numbers = #tpu.dot_dimension_numbers<[1], [0], [0], [1], [0, 0, 1, 1], [], []>} : vector<16x32xf32>, vector<32x32xf32>, vector<16x32xf32> -> vector<16x32xf32>
    %c0_12 = arith.constant 0 : index
    %c0_13 = arith.constant 0 : index
    %25 = vector.load %arg5[%c0_12, %c0_13] : memref<1x32xf32, #tpu.memory_space<vmem>>, vector<1x32xf32>
    %26 = vector.broadcast %25 : vector<1x32xf32> to vector<16x32xf32>
    %27 = arith.addf %24, %26 : vector<16x32xf32>
    %c0_14 = arith.constant 0 : index
    %c0_15 = arith.constant 0 : index
    %28 = vector.load %arg6[%c0_14, %c0_15] : memref<16x32xf32, #tpu.memory_space<vmem>>, vector<16x32xf32>
    tpu.vector_store %arg6[%c0_14, %c0_15], %27 {strides = array<i32>} : memref<16x32xf32, #tpu.memory_space<vmem>>, vector<16x32xf32>,
    return
  }
  func.func @transform_0(%arg0: i32) -> (i32, i32) {
    %c0_i32 = arith.constant 0 : i32
    %c0_i32_0 = arith.constant 0 : i32
    return %arg0, %c0_i32 : i32, i32
  }
  func.func @transform_1(%arg0: i32) -> (i32, i32) {
    %c0_i32 = arith.constant 0 : i32
    %c0_i32_0 = arith.constant 0 : i32
    %c0_i32_1 = arith.constant 0 : i32
    return %c0_i32, %c0_i32_0 : i32, i32
  }
  func.func @transform_2(%arg0: i32) -> (i32, i32) {
    %c0_i32 = arith.constant 0 : i32
    %c0_i32_0 = arith.constant 0 : i32
    %c0_i32_1 = arith.constant 0 : i32
    return %c0_i32, %c0_i32_0 : i32, i32
  }
  func.func @transform_3(%arg0: i32) -> (i32, i32) {
    %c0_i32 = arith.constant 0 : i32
    %c0_i32_0 = arith.constant 0 : i32
    %c0_i32_1 = arith.constant 0 : i32
    return %c0_i32, %c0_i32_0 : i32, i32
  }
  func.func @transform_4(%arg0: i32) -> (i32, i32) {
    %c0_i32 = arith.constant 0 : i32
    %c0_i32_0 = arith.constant 0 : i32
    %c0_i32_1 = arith.constant 0 : i32
    return %c0_i32, %c0_i32_0 : i32, i32
  }
  func.func @transform_5(%arg0: i32) -> (i32, i32) {
    %c0_i32 = arith.constant 0 : i32
    %c0_i32_0 = arith.constant 0 : i32
    return %arg0, %c0_i32 : i32, i32
  }
}

module attributes {stable_mosaic.version = 11 : i64} {
  func.func @_mha_kernel(%arg0: i32, %arg1: i32, %arg2: i32, %arg3: i32, %arg4: memref<1x1x8x8xf32, #tpu.memory_space<vmem>>, %arg5: memref<1x1x16x8xf32, #tpu.memory_space<vmem>>, %arg6: memref<1x1x16x8xf32, #tpu.memory_space<vmem>>, %arg7: memref<1x1x8x8xf32, #tpu.memory_space<vmem>>, %arg8: memref<8x128xf32, #tpu.memory_space<vmem>>, %arg9: memref<8x128xf32, #tpu.memory_space<vmem>>, %arg10: memref<8x8xf32, #tpu.memory_space<vmem>>) attributes {dimension_semantics = [#tpu.dimension_semantics<parallel>, #tpu.dimension_semantics<parallel>, #tpu.dimension_semantics<parallel>, #tpu.dimension_semantics<arbitrary>], iteration_bounds = array<i64: 2, 4, 1, 1>, scalar_prefetch = 0 : i64, scratch_operands = 3 : i64, tpu.core_type = #tpu.core_type<tc>, window_params = [{transform_indices = @transform_0, window_bounds = array<i64: 1, 1, 8, 8>}, {transform_indices = @transform_1, window_bounds = array<i64: 1, 1, 16, 8>}, {transform_indices = @transform_2, window_bounds = array<i64: 1, 1, 16, 8>}, {transform_indices = @transform_3, window_bounds = array<i64: 1, 1, 8, 8>}]} {
    %c0_i32 = arith.constant 0 : i32
    %0 = arith.cmpi eq, %arg3, %c0_i32 : i32
    %1 = arith.extui %0 : i1 to i32
    %c0_i32_0 = arith.constant 0 : i32
    %2 = arith.cmpi ne, %1, %c0_i32_0 : i32
    scf.if %2 {
      %cst_31 = arith.constant 0xFF800000 : f32
      %43 = vector.broadcast %cst_31 : f32 to vector<8x128xf32>
      %c0_32 = arith.constant 0 : index
      %c0_33 = arith.constant 0 : index
      %44 = vector.load %arg8[%c0_32, %c0_33] : memref<8x128xf32, #tpu.memory_space<vmem>>, vector<8x128xf32>
      tpu.vector_store %arg8[%c0_32, %c0_33], %43 {strides = array<i32>} : memref<8x128xf32, #tpu.memory_space<vmem>>, vector<8x128xf32>,
      %cst_34 = arith.constant 0.000000e+00 : f32
      %45 = vector.broadcast %cst_34 : f32 to vector<8x128xf32>
      %c0_35 = arith.constant 0 : index
      %c0_36 = arith.constant 0 : index
      %46 = vector.load %arg9[%c0_35, %c0_36] : memref<8x128xf32, #tpu.memory_space<vmem>>, vector<8x128xf32>
      tpu.vector_store %arg9[%c0_35, %c0_36], %45 {strides = array<i32>} : memref<8x128xf32, #tpu.memory_space<vmem>>, vector<8x128xf32>,
      %cst_37 = arith.constant 0.000000e+00 : f32
      %47 = vector.broadcast %cst_37 : f32 to vector<8x8xf32>
      %c0_38 = arith.constant 0 : index
      %c0_39 = arith.constant 0 : index
      %48 = vector.load %arg10[%c0_38, %c0_39] : memref<8x8xf32, #tpu.memory_space<vmem>>, vector<8x8xf32>
      tpu.vector_store %arg10[%c0_38, %c0_39], %47 {strides = array<i32>} : memref<8x8xf32, #tpu.memory_space<vmem>>, vector<8x8xf32>,
    } else {
    }
    %c0 = arith.constant 0 : index
    %c0_1 = arith.constant 0 : index
    %c0_2 = arith.constant 0 : index
    %c0_3 = arith.constant 0 : index
    %3 = vector.load %arg4[%c0, %c0_1, %c0_2, %c0_3] : memref<1x1x8x8xf32, #tpu.memory_space<vmem>>, vector<1x1x8x8xf32>
    %4 = vector.shape_cast %3 : vector<1x1x8x8xf32> to vector<8x8xf32>
    %cst = arith.constant 0.353553385 : f32
    %5 = vector.broadcast %cst : f32 to vector<8x8xf32>
    %6 = arith.mulf %4, %5 : vector<8x8xf32>
    %c0_4 = arith.constant 0 : index
    %c0_5 = arith.constant 0 : index
    %c0_6 = arith.constant 0 : index
    %c0_7 = arith.constant 0 : index
    %7 = vector.load %arg5[%c0_4, %c0_5, %c0_6, %c0_7] : memref<1x1x16x8xf32, #tpu.memory_space<vmem>>, vector<1x1x16x8xf32>
    %8 = vector.shape_cast %7 : vector<1x1x16x8xf32> to vector<16x8xf32>
    %cst_8 = arith.constant dense<0.000000e+00> : vector<8x16xf32>
    %9 = tpu.matmul %6, %8, %cst_8 {dimension_numbers = #tpu.dot_dimension_numbers<[1], [1], [0], [0], [0, 0, 1, 0], [], []>} : vector<8x8xf32>, vector<16x8xf32>, vector<8x16xf32> -> vector<8x16xf32>
    %c0_9 = arith.constant 0 : index
    %c0_10 = arith.constant 0 : index
    %10 = vector.load %arg8[%c0_9, %c0_10] : memref<8x128xf32, #tpu.memory_space<vmem>>, vector<8x128xf32>
    %cst_11 = arith.constant dense<0xFF800000> : vector<8xf32>
    %11 = vector.multi_reduction <maximumf>, %10, %cst_11 [1] : vector<8x128xf32> to vector<8xf32>
    %12 = vector.shape_cast %11 : vector<8xf32> to vector<8x1xf32>
    %cst_12 = arith.constant dense<0xFF800000> : vector<8xf32>
    %13 = vector.multi_reduction <maximumf>, %9, %cst_12 [1] : vector<8x16xf32> to vector<8xf32>
    %14 = vector.shape_cast %13 : vector<8xf32> to vector<8x1xf32>
    %15 = arith.maximumf %12, %14 : vector<8x1xf32>
    %16 = arith.subf %12, %15 : vector<8x1xf32>
    %17 = math.exp %16 : vector<8x1xf32>
    %18 = vector.broadcast %15 : vector<8x1xf32> to vector<8x16xf32>
    %19 = arith.subf %9, %18 : vector<8x16xf32>
    %20 = math.exp %19 : vector<8x16xf32>
    %c0_13 = arith.constant 0 : index
    %c0_14 = arith.constant 0 : index
    %21 = vector.load %arg9[%c0_13, %c0_14] : memref<8x128xf32, #tpu.memory_space<vmem>>, vector<8x128xf32>
    %22 = vector.broadcast %17 : vector<8x1xf32> to vector<8x128xf32>
    %23 = arith.mulf %22, %21 : vector<8x128xf32>
    %cst_15 = arith.constant dense<0.000000e+00> : vector<8xf32>
    %24 = vector.multi_reduction <add>, %20, %cst_15 [1] : vector<8x16xf32> to vector<8xf32>
    %25 = vector.shape_cast %24 : vector<8xf32> to vector<8x1xf32>
    %26 = vector.broadcast %25 : vector<8x1xf32> to vector<8x128xf32>
    %27 = arith.addf %23, %26 : vector<8x128xf32>
    %c0_16 = arith.constant 0 : index
    %c0_17 = arith.constant 0 : index
    %28 = vector.load %arg9[%c0_16, %c0_17] : memref<8x128xf32, #tpu.memory_space<vmem>>, vector<8x128xf32>
    tpu.vector_store %arg9[%c0_16, %c0_17], %27 {strides = array<i32>} : memref<8x128xf32, #tpu.memory_space<vmem>>, vector<8x128xf32>,
    %c0_18 = arith.constant 0 : index
    %c0_19 = arith.constant 0 : index
    %29 = vector.load %arg10[%c0_18, %c0_19] : memref<8x8xf32, #tpu.memory_space<vmem>>, vector<8x8xf32>
    %30 = vector.broadcast %17 : vector<8x1xf32> to vector<8x8xf32>
    %31 = arith.mulf %30, %29 : vector<8x8xf32>
    %c0_20 = arith.constant 0 : index
    %c0_21 = arith.constant 0 : index
    %c0_22 = arith.constant 0 : index
    %c0_23 = arith.constant 0 : index
    %32 = vector.load %arg6[%c0_20, %c0_21, %c0_22, %c0_23] : memref<1x1x16x8xf32, #tpu.memory_space<vmem>>, vector<1x1x16x8xf32>
    %33 = vector.shape_cast %32 : vector<1x1x16x8xf32> to vector<16x8xf32>
    %cst_24 = arith.constant dense<0.000000e+00> : vector<8x8xf32>
    %34 = tpu.matmul %20, %33, %cst_24 {dimension_numbers = #tpu.dot_dimension_numbers<[1], [0], [0], [1], [0, 0, 1, 1], [], []>} : vector<8x16xf32>, vector<16x8xf32>, vector<8x8xf32> -> vector<8x8xf32>
    %35 = arith.addf %31, %34 : vector<8x8xf32>
    %c0_25 = arith.constant 0 : index
    %c0_26 = arith.constant 0 : index
    %36 = vector.load %arg10[%c0_25, %c0_26] : memref<8x8xf32, #tpu.memory_space<vmem>>, vector<8x8xf32>
    tpu.vector_store %arg10[%c0_25, %c0_26], %35 {strides = array<i32>} : memref<8x8xf32, #tpu.memory_space<vmem>>, vector<8x8xf32>,
    %37 = vector.shape_cast %15 : vector<8x1xf32> to vector<8x1xf32>
    %38 = vector.broadcast %37 : vector<8x1xf32> to vector<8x128xf32>
    %c0_27 = arith.constant 0 : index
    %c0_28 = arith.constant 0 : index
    %39 = vector.load %arg8[%c0_27, %c0_28] : memref<8x128xf32, #tpu.memory_space<vmem>>, vector<8x128xf32>
    tpu.vector_store %arg8[%c0_27, %c0_28], %38 {strides = array<i32>} : memref<8x128xf32, #tpu.memory_space<vmem>>, vector<8x128xf32>,
    %c0_i32_29 = arith.constant 0 : i32
    %40 = arith.cmpi eq, %arg3, %c0_i32_29 : i32
    %41 = arith.extui %40 : i1 to i32
    %c0_i32_30 = arith.constant 0 : i32
    %42 = arith.cmpi ne, %41, %c0_i32_30 : i32
    scf.if %42 {
      %c0_31 = arith.constant 0 : index
      %c0_32 = arith.constant 0 : index
      %43 = vector.load %arg9[%c0_31, %c0_32] : memref<8x128xf32, #tpu.memory_space<vmem>>, vector<8x128xf32>
      %cst_33 = arith.constant dense<0xFF800000> : vector<8xf32>
      %44 = vector.multi_reduction <maximumf>, %43, %cst_33 [1] : vector<8x128xf32> to vector<8xf32>
      %45 = vector.shape_cast %44 : vector<8xf32> to vector<8x1xf32>
      %c0_34 = arith.constant 0 : index
      %c0_35 = arith.constant 0 : index
      %46 = vector.load %arg10[%c0_34, %c0_35] : memref<8x8xf32, #tpu.memory_space<vmem>>, vector<8x8xf32>
      %47 = tpu.reciprocal %45 {approx = true} : vector<8x1xf32> -> vector<8x1xf32>
      %48 = vector.broadcast %47 : vector<8x1xf32> to vector<8x8xf32>
      %49 = arith.mulf %46, %48 : vector<8x8xf32>
      %c0_36 = arith.constant 0 : index
      %c0_37 = arith.constant 0 : index
      %c0_38 = arith.constant 0 : index
      %c0_39 = arith.constant 0 : index
      %50 = vector.load %arg7[%c0_36, %c0_37, %c0_38, %c0_39] : memref<1x1x8x8xf32, #tpu.memory_space<vmem>>, vector<1x1x8x8xf32>
      %51 = vector.shape_cast %50 : vector<1x1x8x8xf32> to vector<8x8xf32>
      %52 = vector.shape_cast %49 : vector<8x8xf32> to vector<1x1x8x8xf32>
      tpu.vector_store %arg7[%c0_36, %c0_37, %c0_38, %c0_39], %52 {strides = array<i32>} : memref<1x1x8x8xf32, #tpu.memory_space<vmem>>, vector<1x1x8x8xf32>,
    } else {
    }
    return
  }
  func.func @transform_0(%arg0: i32, %arg1: i32, %arg2: i32, %arg3: i32) -> (i32, i32, i32, i32) {
    %c0_i32 = arith.constant 0 : i32
    %c0_i32_0 = arith.constant 0 : i32
    return %arg0, %arg1, %arg2, %c0_i32 : i32, i32, i32, i32
  }
  func.func @transform_1(%arg0: i32, %arg1: i32, %arg2: i32, %arg3: i32) -> (i32, i32, i32, i32) {
    %c0_i32 = arith.constant 0 : i32
    %c0_i32_0 = arith.constant 0 : i32
    return %arg0, %arg1, %arg3, %c0_i32 : i32, i32, i32, i32
  }
  func.func @transform_2(%arg0: i32, %arg1: i32, %arg2: i32, %arg3: i32) -> (i32, i32, i32, i32) {
    %c0_i32 = arith.constant 0 : i32
    %c0_i32_0 = arith.constant 0 : i32
    return %arg0, %arg1, %arg3, %c0_i32 : i32, i32, i32, i32
  }
  func.func @transform_3(%arg0: i32, %arg1: i32, %arg2: i32, %arg3: i32) -> (i32, i32, i32, i32) {
    %c0_i32 = arith.constant 0 : i32
    %c0_i32_0 = arith.constant 0 : i32
    return %arg0, %arg1, %arg2, %c0_i32 : i32, i32, i32, i32
  }
}

module attributes {stable_mosaic.version = 11 : i64} {
  func.func @_linear_kernel(%arg0: i32, %arg1: memref<16x32xf32, #tpu.memory_space<vmem>>, %arg2: memref<32x32xf32, #tpu.memory_space<vmem>>, %arg3: memref<1x32xf32, #tpu.memory_space<vmem>>, %arg4: memref<16x32xf32, #tpu.memory_space<vmem>>) attributes {dimension_semantics = [#tpu.dimension_semantics<parallel>], iteration_bounds = array<i64: 1>, scalar_prefetch = 0 : i64, scratch_operands = 0 : i64, tpu.core_type = #tpu.core_type<tc>, window_params = [{transform_indices = @transform_0, window_bounds = array<i64: 16, 32>}, {pipeline_mode = #tpu.pipeline_mode<synchronous>, transform_indices = @transform_1, window_bounds = array<i64: 32, 32>}, {pipeline_mode = #tpu.pipeline_mode<synchronous>, transform_indices = @transform_2, window_bounds = array<i64: 1, 32>}, {transform_indices = @transform_3, window_bounds = array<i64: 16, 32>}]} {
    %c0 = arith.constant 0 : index
    %c0_0 = arith.constant 0 : index
    %0 = vector.load %arg1[%c0, %c0_0] : memref<16x32xf32, #tpu.memory_space<vmem>>, vector<16x32xf32>
    %c0_1 = arith.constant 0 : index
    %c0_2 = arith.constant 0 : index
    %1 = vector.load %arg2[%c0_1, %c0_2] : memref<32x32xf32, #tpu.memory_space<vmem>>, vector<32x32xf32>
    %cst = arith.constant dense<0.000000e+00> : vector<16x32xf32>
    %2 = tpu.matmul %0, %1, %cst {dimension_numbers = #tpu.dot_dimension_numbers<[1], [0], [0], [1], [0, 0, 1, 1], [], []>} : vector<16x32xf32>, vector<32x32xf32>, vector<16x32xf32> -> vector<16x32xf32>
    %c0_3 = arith.constant 0 : index
    %c0_4 = arith.constant 0 : index
    %3 = vector.load %arg3[%c0_3, %c0_4] : memref<1x32xf32, #tpu.memory_space<vmem>>, vector<1x32xf32>
    %4 = vector.broadcast %3 : vector<1x32xf32> to vector<16x32xf32>
    %5 = arith.addf %2, %4 : vector<16x32xf32>
    %c0_5 = arith.constant 0 : index
    %c0_6 = arith.constant 0 : index
    %6 = vector.load %arg4[%c0_5, %c0_6] : memref<16x32xf32, #tpu.memory_space<vmem>>, vector<16x32xf32>
    tpu.vector_store %arg4[%c0_5, %c0_6], %5 {strides = array<i32>} : memref<16x32xf32, #tpu.memory_space<vmem>>, vector<16x32xf32>,
    return
  }
  func.func @transform_0(%arg0: i32) -> (i32, i32) {
    %c0_i32 = arith.constant 0 : i32
    %c0_i32_0 = arith.constant 0 : i32
    return %arg0, %c0_i32 : i32, i32
  }
  func.func @transform_1(%arg0: i32) -> (i32, i32) {
    %c0_i32 = arith.constant 0 : i32
    %c0_i32_0 = arith.constant 0 : i32
    %c0_i32_1 = arith.constant 0 : i32
    return %c0_i32, %c0_i32_0 : i32, i32
  }
  func.func @transform_2(%arg0: i32) -> (i32, i32) {
    %c0_i32 = arith.constant 0 : i32
    %c0_i32_0 = arith.constant 0 : i32
    %c0_i32_1 = arith.constant 0 : i32
    return %c0_i32, %c0_i32_0 : i32, i32
  }
  func.func @transform_3(%arg0: i32) -> (i32, i32) {
    %c0_i32 = arith.constant 0 : i32
    %c0_i32_0 = arith.constant 0 : i32
    return %arg0, %c0_i32 : i32, i32
  }
}

</mosaic_0001>

<llo_original>
// kernel: any_attention_forward.7
$region0: #{any_attention_forward.7}
  #allocation0 [shape = 'u32[]', space=smem, size = 0x4, offset = 0x4, fixed_abs, tag = 'smem constant byte address 0x4 - core index']
  #allocation1 [shape = 'u32[144,128]{1,0:T(1,128)}', space=vmem, size = 0x12000, scoped, tag = 'internal scratch']
  %s0 = inlined_call_operand.vmem [shape: f32[32,32], index: 0, kind: input, shape index: {}]
  %s1 = inlined_call_operand.vmem [shape: f32[1,32], index: 1, kind: input, shape index: {}]
  %s2 = inlined_call_operand.vmem [shape: f32[1,32], index: 2, kind: input, shape index: {}]
  %s3 = inlined_call_operand.vmem [shape: f32[32,32], index: 3, kind: input, shape index: {}]
  %s4 = inlined_call_operand.vmem [shape: f32[1,32], index: 4, kind: input, shape index: {}]
  %s5 = inlined_call_operand.vmem [shape: f32[32,32], index: 5, kind: output, shape index: {}]
  %s6 = sld [smem:[#allocation0]]
  $region30: #{any_attention_forward.7} parent=0
    _
  %s8 = ssub.s32 1, %s6
  %s9 = scalar_select 0, %s8, %s6
  // Predicated region
  $region2: #{any_attention_forward.7} parent=0 // pred_check
    _
  $region3: #{any_attention_forward.7} parent=0 // pred_check_branch
    %11 = sbr.rel (0) target = $region5
  $region4: #{any_attention_forward.7} parent=0 // pred_region
    _
  $region5: #{any_attention_forward.7} parent=0 // pred_fallthru
    _
  // Predicated region
  $region6: #{any_attention_forward.7} parent=0 // pred_check
    _
  $region7: #{any_attention_forward.7} parent=0 // pred_check_branch
    %13 = sbr.rel (0) target = $region9
  $region8: #{any_attention_forward.7} parent=0 // pred_region
    _
  $region9: #{any_attention_forward.7} parent=0 // pred_fallthru
    _
  // Predicated region
  $region10: #{any_attention_forward.7} parent=0 // pred_check
    _
  $region11: #{any_attention_forward.7} parent=0 // pred_check_branch
    %15 = sbr.rel (0) target = $region13
  $region12: #{any_attention_forward.7} parent=0 // pred_region
    _
  $region13: #{any_attention_forward.7} parent=0 // pred_fallthru
    _
  // Predicated region
  $region14: #{any_attention_forward.7} parent=0 // pred_check
    _
  $region15: #{any_attention_forward.7} parent=0 // pred_check_branch
    %17 = sbr.rel (0) target = $region17
  $region16: #{any_attention_forward.7} parent=0 // pred_region
    _
  $region17: #{any_attention_forward.7} parent=0 // pred_fallthru
    _
  // Predicated region
  $region18: #{any_attention_forward.7} parent=0 // pred_check
    _
  $region19: #{any_attention_forward.7} parent=0 // pred_check_branch
    %19 = sbr.rel (0) target = $region21
  $region20: #{any_attention_forward.7} parent=0 // pred_region
    _
  $region21: #{any_attention_forward.7} parent=0 // pred_fallthru
    _
  %v20 = vld [vmem:[%s0] sm:$0xff]
  %v21 = vld [vmem:[%s0 + $0x8] sm:$0xff]
  %v22 = vld [vmem:[%s0 + $0x10] sm:$0xff]
  %v23 = vld [vmem:[%s0 + $0x18] sm:$0xff]
  %vm24 = vcmask 261120
  %v25 = vsel %vm24, %v20, 0.0
  %26 = vadd.xlane.f32.xlu0 %v25
  %v27 = vpop.xlane.xlu0 %26
  %v28 = vsel %vm24, %v21, 0.0
  %29 = vadd.xlane.f32.xlu0 %v28
  %v30 = vpop.xlane.xlu0 %29
  %v31 = vsel %vm24, %v22, 0.0
  %32 = vadd.xlane.f32.xlu0 %v31
  %v33 = vpop.xlane.xlu0 %32
  %v34 = vsel %vm24, %v23, 0.0
  %35 = vadd.xlane.f32.xlu0 %v34
  %v36 = vpop.xlane.xlu0 %35
  %v37 = vrcp.pop 32.0
  %v38 = vmul.f32 %v27, %v37
  %v39 = vmul.f32 %v30, %v37
  %v40 = vmul.f32 %v33, %v37
  %v41 = vmul.f32 %v36, %v37
  %v42 = vsub.f32 %v20, %v38
  %v43 = vsub.f32 %v21, %v39
  %v44 = vsub.f32 %v22, %v40
  %v45 = vsub.f32 %v23, %v41
  %v46 = vmul.f32 %v42, %v42
  %v47 = vmul.f32 %v43, %v43
  %v48 = vmul.f32 %v44, %v44
  %v49 = vmul.f32 %v45, %v45
  %v50 = vsel %vm24, %v46, 0.0
  %51 = vadd.xlane.f32.xlu0 %v50
  %v52 = vpop.xlane.xlu0 %51
  %v53 = vsel %vm24, %v47, 0.0
  %54 = vadd.xlane.f32.xlu0 %v53
  %v55 = vpop.xlane.xlu0 %54
  %v56 = vsel %vm24, %v48, 0.0
  %57 = vadd.xlane.f32.xlu0 %v56
  %v58 = vpop.xlane.xlu0 %57
  %v59 = vsel %vm24, %v49, 0.0
  %60 = vadd.xlane.f32.xlu0 %v59
  %v61 = vpop.xlane.xlu0 %60
  %v62 = vmul.f32 %v52, %v37
  %v63 = vmul.f32 %v55, %v37
  %v64 = vmul.f32 %v58, %v37
  %v65 = vmul.f32 %v61, %v37
  %v66 = vadd.f32 %v62, 1e-05
  %v67 = vadd.f32 %v63, 1e-05
  %v68 = vadd.f32 %v64, 1e-05
  %v69 = vadd.f32 %v65, 1e-05
  %v70 = vrsqrt.pop %v66
  %v71 = vrsqrt.pop %v67
  %v72 = vrsqrt.pop %v68
  %v73 = vrsqrt.pop %v69
  %v74 = vmul.f32 %v42, %v70
  %v75 = vmul.f32 %v43, %v71
  %v76 = vmul.f32 %v44, %v72
  %v77 = vmul.f32 %v45, %v73
  %v78 = vld [vmem:[%s1] sm:$0x1]
  %v80 = vlaneseq
  %v81 = vshrl.u32 %v80, 7
  %v82 = vsub.s32 0, %v81
  %v83 = vrot.slane %v78, %v82
  %v85 = vmul.f32 %v74, %v83
  %v86 = vmul.f32 %v75, %v83
  %v87 = vmul.f32 %v76, %v83
  %v88 = vmul.f32 %v77, %v83
  %v89 = vld [vmem:[%s2] sm:$0x1]
  %v91 = vlaneseq
  %v92 = vshrl.u32 %v91, 7
  %v93 = vsub.s32 0, %v92
  %v94 = vrot.slane %v89, %v93
  %v96 = vadd.f32 %v85, %v94
  %v97 = vadd.f32 %v86, %v94
  %v98 = vadd.f32 %v87, %v94
  %v99 = vadd.f32 %v88, %v94
  %v100 = vld [vmem:[%s3] sm:$0xff]
  %v101 = vld [vmem:[%s3 + $0x8] sm:$0xff]
  %v102 = vld [vmem:[%s3 + $0x10] sm:$0xff]
  %v103 = vld [vmem:[%s3 + $0x18] sm:$0xff]
  %v104 = vld [vmem:[%s4] sm:$0x1]
  %v106 = vlaneseq
  %v107 = vshrl.u32 %v106, 7
  %v108 = vsub.s32 0, %v107
  %v109 = vrot.slane %v104, %v108
  %v112 = vsel %vm24, %v96, 0
  %v115 = vsel %vm24, %v97, 0
  %v118 = vsel %vm24, %v98, 0
  %v121 = vsel %vm24, %v99, 0
  %123 = vmatprep.subr.mxu0 0.0
  %124 = vmatpush1.msra.mxu0 %v100
  %125 = vmatprep.subr.mxu0 0.0
  %126 = vmatpush1.msra.mxu0 %v101
  %127 = vmatprep.subr.mxu0 0.0
  %128 = vmatpush1.msra.mxu0 %v102
  %129 = vmatprep.subr.mxu0 0.0
  %130 = vmatpush1.msra.mxu0 %v103
  %131 = vmatprep.subr.mxu0 0.0
  %132 = vmatpush1.msra.mxu0 0.0
  %133 = vmatprep.subr.mxu0 0.0
  %134 = vmatpush1.msra.mxu0 0.0
  %135 = vmatprep.subr.mxu0 0.0
  %136 = vmatpush1.msra.mxu0 0.0
  %137 = vmatprep.subr.mxu0 0.0
  %138 = vmatpush1.msra.mxu0 0.0
  %139 = vmatprep.subr.mxu0 0.0
  %140 = vmatpush1.msra.mxu0 0.0
  %141 = vmatprep.subr.mxu0 0.0
  %142 = vmatpush1.msra.mxu0 0.0
  %143 = vmatprep.subr.mxu0 0.0
  %144 = vmatpush1.msra.mxu0 0.0
  %145 = vmatprep.subr.mxu0 0.0
  %146 = vmatpush1.msra.mxu0 0.0
  %147 = vmatprep.subr.mxu0 0.0
  %148 = vmatpush1.msra.mxu0 0.0
  %149 = vmatprep.subr.mxu0 0.0
  %150 = vmatpush1.msra.mxu0 0.0
  %151 = vmatprep.subr.mxu0 0.0
  %152 = vmatpush1.msra.mxu0 0.0
  %153 = vmatprep.subr.mxu0 0.0
  %154 = vmatpush1.msra.mxu0 0.0
  %155 = vmatprep.subr.mxu0 0.0
  %156 = vmatpush1.msra.mxu0 0.0
  %157 = vmatprep.subr.mxu0 0.0
  %158 = vmatpush1.msra.mxu0 0.0
  %159 = vmatprep.subr.mxu0 0.0
  %160 = vmatpush1.msra.mxu0 0.0
  %161 = vmatprep.subr.mxu0 0.0
  %162 = vmatpush1.msra.mxu0 0.0
  %163 = vmatprep.subr.mxu0 0.0
  %164 = vmatpush1.msra.mxu0 0.0
  %165 = vmatprep.subr.mxu0 0.0
  %166 = vmatpush1.msra.mxu0 0.0
  %167 = vmatprep.subr.mxu0 0.0
  %168 = vmatpush1.msra.mxu0 0.0
  %169 = vmatprep.subr.mxu0 0.0
  %170 = vmatpush1.msra.mxu0 0.0
  %171 = vmatprep.subr.mxu0 0.0
  %172 = vmatpush1.msra.mxu0 0.0
  %173 = vmatprep.subr.mxu0 0.0
  %174 = vmatpush1.msra.mxu0 0.0
  %175 = vmatprep.subr.mxu0 0.0
  %176 = vmatpush1.msra.mxu0 0.0
  %177 = vmatprep.subr.mxu0 0.0
  %178 = vmatpush1.msra.mxu0 0.0
  %179 = vmatprep.subr.mxu0 0.0
  %180 = vmatpush1.msra.mxu0 0.0
  %181 = vmatprep.subr.mxu0 0.0
  %182 = vmatpush1.msra.mxu0 0.0
  %183 = vmatprep.subr.mxu0 0.0
  %184 = vmatpush1.msra.mxu0 0.0
  %185 = vmatprep.subr.mxu0 0.0
  %186 = vmatpush1.msra.mxu0 0.0
  %187 = vmatprep.mubr.f32.mxu0 0.0
  %188 = vmatmul.mubr.f32.gmra.mrb[0].mxu0 %v112
  %v189 = vpop.f32.mrb[0].mxu0
  %v190 = vadd.f32 %v109, %v189
  %v191 = vpop.f32.mrb[0].mxu0
  %192 = vmatprep.mubr.f32.mxu0 0.0
  %193 = vmatmul.mubr.f32.gmra.mrb[0].mxu0 %v115
  %v194 = vpop.f32.mrb[0].mxu0
  %v195 = vadd.f32 %v109, %v194
  %v196 = vpop.f32.mrb[0].mxu0
  %197 = vmatprep.mubr.f32.mxu0 0.0
  %198 = vmatmul.mubr.f32.gmra.mrb[0].mxu0 %v118
  %v199 = vpop.f32.mrb[0].mxu0
  %v200 = vadd.f32 %v109, %v199
  %v201 = vpop.f32.mrb[0].mxu0
  %202 = vmatprep.mubr.f32.mxu0 0.0
  %203 = vmatmul.mubr.f32.gmra.mrb[0].mxu0 %v121
  %v204 = vpop.f32.mrb[0].mxu0
  %v205 = vadd.f32 %v109, %v204
  %v206 = vpop.f32.mrb[0].mxu0
  %207 = vdwg.mxu0
  %208 = vst.msk [vmem:[%s5] sm:$0xff] %vm24, %v190
  %209 = vst.msk [vmem:[%s5 + $0x8] sm:$0xff] %vm24, %v195
  %210 = vst.msk [vmem:[%s5 + $0x10] sm:$0xff] %vm24, %v200
  %211 = vst.msk [vmem:[%s5 + $0x18] sm:$0xff] %vm24, %v205
  // Predicated region
  $region22: #{any_attention_forward.7} parent=0 // pred_check
    _
  $region23: #{any_attention_forward.7} parent=0 // pred_check_branch
    %213 = sbr.rel (0) target = $region25
  $region24: #{any_attention_forward.7} parent=0 // pred_region
    _
  $region25: #{any_attention_forward.7} parent=0 // pred_fallthru
    _
  // Predicated region
  $region26: #{any_attention_forward.7} parent=0 // pred_check
    _
  $region27: #{any_attention_forward.7} parent=0 // pred_check_branch
    %215 = sbr.rel (0) target = $region29
  $region28: #{any_attention_forward.7} parent=0 // pred_region
    _
  $region29: #{any_attention_forward.7} parent=0 // pred_fallthru
    _

// kernel: any_attention_forward.5
$region0: #{any_attention_forward.5}
  #allocation0 [shape = 'u32[]', space=smem, size = 0x4, offset = 0x4, fixed_abs, tag = 'smem constant byte address 0x4 - core index']
  #allocation1 [shape = 'u32[144,128]{1,0:T(1,128)}', space=vmem, size = 0x12000, scoped, tag = 'internal scratch']
  %s0 = inlined_call_operand.vmem [shape: f32[16,32], index: 0, kind: input, shape index: {}]
  %s1 = inlined_call_operand.vmem [shape: f32[1,32], index: 1, kind: input, shape index: {}]
  %s2 = inlined_call_operand.vmem [shape: f32[1,32], index: 2, kind: input, shape index: {}]
  %s3 = inlined_call_operand.vmem [shape: f32[32,32], index: 3, kind: input, shape index: {}]
  %s4 = inlined_call_operand.vmem [shape: f32[1,32], index: 4, kind: input, shape index: {}]
  %s5 = inlined_call_operand.vmem [shape: f32[16,32], index: 5, kind: output, shape index: {}]
  %s6 = sld [smem:[#allocation0]]
  $region30: #{any_attention_forward.5} parent=0
    _
  %s8 = ssub.s32 1, %s6
  %s9 = scalar_select 0, %s8, %s6
  // Predicated region
  $region2: #{any_attention_forward.5} parent=0 // pred_check
    _
  $region3: #{any_attention_forward.5} parent=0 // pred_check_branch
    %11 = sbr.rel (0) target = $region5
  $region4: #{any_attention_forward.5} parent=0 // pred_region
    _
  $region5: #{any_attention_forward.5} parent=0 // pred_fallthru
    _
  // Predicated region
  $region6: #{any_attention_forward.5} parent=0 // pred_check
    _
  $region7: #{any_attention_forward.5} parent=0 // pred_check_branch
    %13 = sbr.rel (0) target = $region9
  $region8: #{any_attention_forward.5} parent=0 // pred_region
    _
  $region9: #{any_attention_forward.5} parent=0 // pred_fallthru
    _
  // Predicated region
  $region10: #{any_attention_forward.5} parent=0 // pred_check
    _
  $region11: #{any_attention_forward.5} parent=0 // pred_check_branch
    %15 = sbr.rel (0) target = $region13
  $region12: #{any_attention_forward.5} parent=0 // pred_region
    _
  $region13: #{any_attention_forward.5} parent=0 // pred_fallthru
    _
  // Predicated region
  $region14: #{any_attention_forward.5} parent=0 // pred_check
    _
  $region15: #{any_attention_forward.5} parent=0 // pred_check_branch
    %17 = sbr.rel (0) target = $region17
  $region16: #{any_attention_forward.5} parent=0 // pred_region
    _
  $region17: #{any_attention_forward.5} parent=0 // pred_fallthru
    _
  // Predicated region
  $region18: #{any_attention_forward.5} parent=0 // pred_check
    _
  $region19: #{any_attention_forward.5} parent=0 // pred_check_branch
    %19 = sbr.rel (0) target = $region21
  $region20: #{any_attention_forward.5} parent=0 // pred_region
    _
  $region21: #{any_attention_forward.5} parent=0 // pred_fallthru
    _
  %v20 = vld [vmem:[%s0] sm:$0xff]
  %v21 = vld [vmem:[%s0 + $0x8] sm:$0xff]
  %vm22 = vcmask 261120
  %v23 = vsel %vm22, %v20, 0.0
  %24 = vadd.xlane.f32.xlu0 %v23
  %v25 = vpop.xlane.xlu0 %24
  %v26 = vsel %vm22, %v21, 0.0
  %27 = vadd.xlane.f32.xlu0 %v26
  %v28 = vpop.xlane.xlu0 %27
  %v29 = vrcp.pop 32.0
  %v30 = vmul.f32 %v25, %v29
  %v31 = vmul.f32 %v28, %v29
  %v32 = vsub.f32 %v20, %v30
  %v33 = vsub.f32 %v21, %v31
  %v34 = vmul.f32 %v32, %v32
  %v35 = vmul.f32 %v33, %v33
  %v36 = vsel %vm22, %v34, 0.0
  %37 = vadd.xlane.f32.xlu0 %v36
  %v38 = vpop.xlane.xlu0 %37
  %v39 = vsel %vm22, %v35, 0.0
  %40 = vadd.xlane.f32.xlu0 %v39
  %v41 = vpop.xlane.xlu0 %40
  %v42 = vmul.f32 %v38, %v29
  %v43 = vmul.f32 %v41, %v29
  %v44 = vadd.f32 %v42, 1e-05
  %v45 = vadd.f32 %v43, 1e-05
  %v46 = vrsqrt.pop %v44
  %v47 = vrsqrt.pop %v45
  %v48 = vmul.f32 %v32, %v46
  %v49 = vmul.f32 %v33, %v47
  %v50 = vld [vmem:[%s1] sm:$0x1]
  %v52 = vlaneseq
  %v53 = vshrl.u32 %v52, 7
  %v54 = vsub.s32 0, %v53
  %v55 = vrot.slane %v50, %v54
  %v57 = vmul.f32 %v48, %v55
  %v58 = vmul.f32 %v49, %v55
  %v59 = vld [vmem:[%s2] sm:$0x1]
  %v61 = vlaneseq
  %v62 = vshrl.u32 %v61, 7
  %v63 = vsub.s32 0, %v62
  %v64 = vrot.slane %v59, %v63
  %v66 = vadd.f32 %v57, %v64
  %v67 = vadd.f32 %v58, %v64
  %v68 = vld [vmem:[%s3] sm:$0xff]
  %v69 = vld [vmem:[%s3 + $0x8] sm:$0xff]
  %v70 = vld [vmem:[%s3 + $0x10] sm:$0xff]
  %v71 = vld [vmem:[%s3 + $0x18] sm:$0xff]
  %v72 = vld [vmem:[%s4] sm:$0x1]
  %v74 = vlaneseq
  %v75 = vshrl.u32 %v74, 7
  %v76 = vsub.s32 0, %v75
  %v77 = vrot.slane %v72, %v76
  %v80 = vsel %vm22, %v66, 0
  %v83 = vsel %vm22, %v67, 0
  %85 = vmatprep.subr.mxu0 0.0
  %86 = vmatpush1.msra.mxu0 %v68
  %87 = vmatprep.subr.mxu0 0.0
  %88 = vmatpush1.msra.mxu0 %v69
  %89 = vmatprep.subr.mxu0 0.0
  %90 = vmatpush1.msra.mxu0 %v70
  %91 = vmatprep.subr.mxu0 0.0
  %92 = vmatpush1.msra.mxu0 %v71
  %93 = vmatprep.subr.mxu0 0.0
  %94 = vmatpush1.msra.mxu0 0.0
  %95 = vmatprep.subr.mxu0 0.0
  %96 = vmatpush1.msra.mxu0 0.0
  %97 = vmatprep.subr.mxu0 0.0
  %98 = vmatpush1.msra.mxu0 0.0
  %99 = vmatprep.subr.mxu0 0.0
  %100 = vmatpush1.msra.mxu0 0.0
  %101 = vmatprep.subr.mxu0 0.0
  %102 = vmatpush1.msra.mxu0 0.0
  %103 = vmatprep.subr.mxu0 0.0
  %104 = vmatpush1.msra.mxu0 0.0
  %105 = vmatprep.subr.mxu0 0.0
  %106 = vmatpush1.msra.mxu0 0.0
  %107 = vmatprep.subr.mxu0 0.0
  %108 = vmatpush1.msra.mxu0 0.0
  %109 = vmatprep.subr.mxu0 0.0
  %110 = vmatpush1.msra.mxu0 0.0
  %111 = vmatprep.subr.mxu0 0.0
  %112 = vmatpush1.msra.mxu0 0.0
  %113 = vmatprep.subr.mxu0 0.0
  %114 = vmatpush1.msra.mxu0 0.0
  %115 = vmatprep.subr.mxu0 0.0
  %116 = vmatpush1.msra.mxu0 0.0
  %117 = vmatprep.subr.mxu0 0.0
  %118 = vmatpush1.msra.mxu0 0.0
  %119 = vmatprep.subr.mxu0 0.0
  %120 = vmatpush1.msra.mxu0 0.0
  %121 = vmatprep.subr.mxu0 0.0
  %122 = vmatpush1.msra.mxu0 0.0
  %123 = vmatprep.subr.mxu0 0.0
  %124 = vmatpush1.msra.mxu0 0.0
  %125 = vmatprep.subr.mxu0 0.0
  %126 = vmatpush1.msra.mxu0 0.0
  %127 = vmatprep.subr.mxu0 0.0
  %128 = vmatpush1.msra.mxu0 0.0
  %129 = vmatprep.subr.mxu0 0.0
  %130 = vmatpush1.msra.mxu0 0.0
  %131 = vmatprep.subr.mxu0 0.0
  %132 = vmatpush1.msra.mxu0 0.0
  %133 = vmatprep.subr.mxu0 0.0
  %134 = vmatpush1.msra.mxu0 0.0
  %135 = vmatprep.subr.mxu0 0.0
  %136 = vmatpush1.msra.mxu0 0.0
  %137 = vmatprep.subr.mxu0 0.0
  %138 = vmatpush1.msra.mxu0 0.0
  %139 = vmatprep.subr.mxu0 0.0
  %140 = vmatpush1.msra.mxu0 0.0
  %141 = vmatprep.subr.mxu0 0.0
  %142 = vmatpush1.msra.mxu0 0.0
  %143 = vmatprep.subr.mxu0 0.0
  %144 = vmatpush1.msra.mxu0 0.0
  %145 = vmatprep.subr.mxu0 0.0
  %146 = vmatpush1.msra.mxu0 0.0
  %147 = vmatprep.subr.mxu0 0.0
  %148 = vmatpush1.msra.mxu0 0.0
  %149 = vmatprep.mubr.f32.mxu0 0.0
  %150 = vmatmul.mubr.f32.gmra.mrb[0].mxu0 %v80
  %v151 = vpop.f32.mrb[0].mxu0
  %v152 = vadd.f32 %v77, %v151
  %v153 = vpop.f32.mrb[0].mxu0
  %154 = vmatprep.mubr.f32.mxu0 0.0
  %155 = vmatmul.mubr.f32.gmra.mrb[0].mxu0 %v83
  %v156 = vpop.f32.mrb[0].mxu0
  %v157 = vadd.f32 %v77, %v156
  %v158 = vpop.f32.mrb[0].mxu0
  %159 = vdwg.mxu0
  %160 = vst.msk [vmem:[%s5] sm:$0xff] %vm22, %v152
  %161 = vst.msk [vmem:[%s5 + $0x8] sm:$0xff] %vm22, %v157
  // Predicated region
  $region22: #{any_attention_forward.5} parent=0 // pred_check
    _
  $region23: #{any_attention_forward.5} parent=0 // pred_check_branch
    %163 = sbr.rel (0) target = $region25
  $region24: #{any_attention_forward.5} parent=0 // pred_region
    _
  $region25: #{any_attention_forward.5} parent=0 // pred_fallthru
    _
  // Predicated region
  $region26: #{any_attention_forward.5} parent=0 // pred_check
    _
  $region27: #{any_attention_forward.5} parent=0 // pred_check_branch
    %165 = sbr.rel (0) target = $region29
  $region28: #{any_attention_forward.5} parent=0 // pred_region
    _
  $region29: #{any_attention_forward.5} parent=0 // pred_fallthru
    _

// kernel: any_attention_forward.8
$region0: #{any_attention_forward.8}
  #allocation0 [shape = 'u32[]', space=smem, size = 0x4, offset = 0x4, fixed_abs, tag = 'smem constant byte address 0x4 - core index']
  #allocation1 [shape = 'u32[144,128]{1,0:T(1,128)}', space=vmem, size = 0x12000, scoped, tag = 'internal scratch']
  #allocation2 [shape = 'f32[8,128]{1,0:T(8,128)}', space=vmem, size = 0x1000, scoped, tag = 'scratch operand']
  #allocation3 [shape = 'f32[8,128]{1,0:T(8,128)}', space=vmem, size = 0x1000, scoped, tag = 'scratch operand']
  #allocation4 [shape = 'f32[8,8]{1,0:T(8,128)}', space=vmem, size = 0x1000, scoped, tag = 'scratch operand']
  %s0 = inlined_call_operand.vmem [shape: f32[2,4,8,8], index: 0, kind: input, shape index: {}]
  %s1 = inlined_call_operand.vmem [shape: f32[2,4,16,8], index: 1, kind: input, shape index: {}]
  %s2 = inlined_call_operand.vmem [shape: f32[2,4,16,8], index: 2, kind: input, shape index: {}]
  %s3 = inlined_call_operand.vmem [shape: f32[2,4,8,8], index: 3, kind: output, shape index: {}]
  %s4 = sld [smem:[#allocation0]]
  $region53: #{any_attention_forward.8} parent=0
    _
  %s6 = ssub.s32 1, %s4
  %s7 = scalar_select 0, %s6, %s4
  loop: start=0, step=1, limit=10
  $region2: #{any_attention_forward.8} parent=0 // loop_pre_header
    _
  $region3: #{any_attention_forward.8} parent=0 // loop_header
    %s9 = sphi 0, %s13
    %p10 = scmp.ge.s32.totalorder %s9, 10
    %s16 = sphi 0, %s42
    %s17 = sphi 0, %s38
    %s18 = sphi 0, %s34
    %s19 = sphi 0, %s30
    %s20 = sphi 0, %s16
    %s21 = sphi 0, %s17
    %s22 = sphi 0, %s18
    %s23 = sphi 0, %s19
    %s24 = sphi 0, %s20
    %s25 = sphi 0, %s21
    %s26 = sphi 0, %s22
    %s27 = sphi 0, %s23
    %s49 = sphi 0, %s51
    %s52 = sphi 0, %s49
    %s53 = sphi 0, %s52
    %s69 = sphi 0, %s53
    %s79 = sphi 0, %s81
    %s82 = sphi 0, %s79
    %s83 = sphi 0, %s82
    %s99 = sphi 0, %s83
    %s109 = sphi 0, %s111
    %s112 = sphi 0, %s109
    %s113 = sphi 0, %s112
    %s129 = sphi 0, %s113
    %s139 = sphi 0, %s141
    %s142 = sphi 0, %s139
    %s143 = sphi 0, %s142
    %s159 = sphi 0, %s143
  $region4: #{any_attention_forward.8} parent=0 // loop_header_branch
    %12 = sbr.rel (%p10) target = $region8
  $region5: #{any_attention_forward.8} parent=0 // loop_body
    %s14 = ssub.s32 %s9, 1
    %s15 = ssub.s32 %s9, 2
    %s28 = sadd.s32 1, %s19
    %p29 = scmp.ge.s32.totalorder %s28, 1
    %s30 = scalar_select %p29, 0, %s28
    %s31 = sadd.s32 1, %s18
    %s32 = scalar_select %p29, %s31, %s18
    %p33 = scmp.ge.s32.totalorder %s32, 1
    %s34 = scalar_select %p33, 0, %s32
    %s35 = sadd.s32 1, %s17
    %s36 = scalar_select %p33, %s35, %s17
    %p37 = scmp.ge.s32.totalorder %s36, 4
    %s38 = scalar_select %p37, 0, %s36
    %s39 = sadd.s32 1, %s16
    %s40 = scalar_select %p37, %s39, %s16
    %p41 = scmp.ge.s32.totalorder %s40, 2
    %s42 = scalar_select %p41, 0, %s40
    %s43 = ssub.s32 %s16, %s42
    %s44 = ssub.s32 %s17, %s38
    %s45 = sor.u32 %s43, %s44
    %s46 = ssub.s32 %s18, %s34
    %s47 = sor.u32 %s45, %s46
    %p48 = scmp.eq.s32.totalorder %s47, 0
    %s50 = sadd.s32 %s49, 1
    %s51 = scalar_select %p48, %s49, %s50
    %p54 = pneg %p48
    %p55 = scmp.eq.s32.totalorder %s9, 7
    %p56 = por %p54, %p55
    %p57 = scmp.ne.s32.totalorder %s49, %s52
    %p58 = scmp.eq.s32.totalorder %s9, 0
    %p59 = por %p57, %p58
    %p60 = scmp.ne.s32.totalorder %s49, %s52
    %p61 = scmp.eq.s32.totalorder %s14, 7
    %p62 = por %p60, %p61
    %p63 = scmp.ne.s32.totalorder %s52, %s53
    %p64 = scmp.eq.s32.totalorder %s14, 0
    %p65 = por %p63, %p64
    %p66 = scmp.ne.s32.totalorder %s52, %s53
    %p67 = scmp.eq.s32.totalorder %s15, 7
    %p68 = por %p66, %p67
    %p70 = scmp.ne.s32.totalorder %s53, %s69
    %p71 = scmp.eq.s32.totalorder %s15, 0
    %p72 = por %p70, %p71
    %s73 = ssub.s32 %s16, %s42
    %s74 = ssub.s32 %s17, %s38
    %s75 = sor.u32 %s73, %s74
    %s76 = ssub.s32 %s19, %s30
    %s77 = sor.u32 %s75, %s76
    %p78 = scmp.eq.s32.totalorder %s77, 0
    %s80 = sadd.s32 %s79, 1
    %s81 = scalar_select %p78, %s79, %s80
    %p84 = pneg %p78
    %p85 = scmp.eq.s32.totalorder %s9, 7
    %p86 = por %p84, %p85
    %p87 = scmp.ne.s32.totalorder %s79, %s82
    %p88 = scmp.eq.s32.totalorder %s9, 0
    %p89 = por %p87, %p88
    %p90 = scmp.ne.s32.totalorder %s79, %s82
    %p91 = scmp.eq.s32.totalorder %s14, 7
    %p92 = por %p90, %p91
    %p93 = scmp.ne.s32.totalorder %s82, %s83
    %p94 = scmp.eq.s32.totalorder %s14, 0
    %p95 = por %p93, %p94
    %p96 = scmp.ne.s32.totalorder %s82, %s83
    %p97 = scmp.eq.s32.totalorder %s15, 7
    %p98 = por %p96, %p97
    %p100 = scmp.ne.s32.totalorder %s83, %s99
    %p101 = scmp.eq.s32.totalorder %s15, 0
    %p102 = por %p100, %p101
    %s103 = ssub.s32 %s16, %s42
    %s104 = ssub.s32 %s17, %s38
    %s105 = sor.u32 %s103, %s104
    %s106 = ssub.s32 %s19, %s30
    %s107 = sor.u32 %s105, %s106
    %p108 = scmp.eq.s32.totalorder %s107, 0
    %s110 = sadd.s32 %s109, 1
    %s111 = scalar_select %p108, %s109, %s110
    %p114 = pneg %p108
    %p115 = scmp.eq.s32.totalorder %s9, 7
    %p116 = por %p114, %p115
    %p117 = scmp.ne.s32.totalorder %s109, %s112
    %p118 = scmp.eq.s32.totalorder %s9, 0
    %p119 = por %p117, %p118
    %p120 = scmp.ne.s32.totalorder %s109, %s112
    %p121 = scmp.eq.s32.totalorder %s14, 7
    %p122 = por %p120, %p121
    %p123 = scmp.ne.s32.totalorder %s112, %s113
    %p124 = scmp.eq.s32.totalorder %s14, 0
    %p125 = por %p123, %p124
    %p126 = scmp.ne.s32.totalorder %s112, %s113
    %p127 = scmp.eq.s32.totalorder %s15, 7
    %p128 = por %p126, %p127
    %p130 = scmp.ne.s32.totalorder %s113, %s129
    %p131 = scmp.eq.s32.totalorder %s15, 0
    %p132 = por %p130, %p131
    %s133 = ssub.s32 %s16, %s42
    %s134 = ssub.s32 %s17, %s38
    %s135 = sor.u32 %s133, %s134
    %s136 = ssub.s32 %s18, %s34
    %s137 = sor.u32 %s135, %s136
    %p138 = scmp.eq.s32.totalorder %s137, 0
    %s140 = sadd.s32 %s139, 1
    %s141 = scalar_select %p138, %s139, %s140
    %p144 = pneg %p138
    %p145 = scmp.eq.s32.totalorder %s9, 7
    %p146 = por %p144, %p145
    %p147 = scmp.ne.s32.totalorder %s139, %s142
    %p148 = scmp.eq.s32.totalorder %s9, 0
    %p149 = por %p147, %p148
    %p150 = scmp.ne.s32.totalorder %s139, %s142
    %p151 = scmp.eq.s32.totalorder %s14, 7
    %p152 = por %p150, %p151
    %p153 = scmp.ne.s32.totalorder %s142, %s143
    %p154 = scmp.eq.s32.totalorder %s14, 0
    %p155 = por %p153, %p154
    %p156 = scmp.ne.s32.totalorder %s142, %s143
    %p157 = scmp.eq.s32.totalorder %s15, 7
    %p158 = por %p156, %p157
    %p160 = scmp.ne.s32.totalorder %s143, %s159
    %p161 = scmp.eq.s32.totalorder %s15, 0
    %p162 = por %p160, %p161
    %p163 = scmp.le.s32.totalorder 1, %s9
    %p164 = scmp.lt.s32.totalorder %s9, 9
    %p165 = pnand %p163, %p164
    %p166 = pneg %p165
    // Predicated region
    $region9: #{any_attention_forward.8} parent=5 // pred_check
      _
    $region10: #{any_attention_forward.8} parent=5 // pred_check_branch
      %168 = sbr.rel (%p165) target = $region12
    $region11: #{any_attention_forward.8} parent=5 // pred_region
      %s169 = ssub.s32 %s9, 1
    $region12: #{any_attention_forward.8} parent=5 // pred_fallthru
      _
    %p170 = scmp.lt.s32.totalorder %s9, 8
    // Predicated region
    $region13: #{any_attention_forward.8} parent=5 // pred_check
      %p171 = pneg %p170
    $region14: #{any_attention_forward.8} parent=5 // pred_check_branch
      %173 = sbr.rel (%p171) target = $region16
    $region15: #{any_attention_forward.8} parent=5 // pred_region
      // Predicated region
      $region17: #{any_attention_forward.8} parent=15 // pred_check
        %p174 = pneg %p59
      $region18: #{any_attention_forward.8} parent=15 // pred_check_branch
        %176 = sbr.rel (%p174) target = $region20
      $region19: #{any_attention_forward.8} parent=15 // pred_region
        %p177 = scmp.lt.s32.totalorder %s16, 1
        %s178 = scalar_select %p177, %s16, 1
        %p179 = scmp.lt.s32.totalorder %s17, 3
        %s180 = scalar_select %p179, %s17, 3
        %p181 = scmp.lt.s32.totalorder %s18, 0
        %s182 = scalar_select %p181, %s18, 0
        %s183 = sadd.s32 %s182, %s180
        %s184 = smul.addr %s178, 4
        %s185 = sadd.s32 %s183, %s184
        %s186 = smul.addr %s185, 8
        %s187 = scalar_lea.vmem %s0, %s186
      $region20: #{any_attention_forward.8} parent=15 // pred_fallthru
        _
      // Predicated region
      $region21: #{any_attention_forward.8} parent=15 // pred_check
        %p188 = pneg %p89
      $region22: #{any_attention_forward.8} parent=15 // pred_check_branch
        %190 = sbr.rel (%p188) target = $region24
      $region23: #{any_attention_forward.8} parent=15 // pred_region
        %s191 = smul.u32 2, %s19
        %p192 = scmp.lt.s32.totalorder %s16, 1
        %s193 = scalar_select %p192, %s16, 1
        %p194 = scmp.lt.s32.totalorder %s17, 3
        %s195 = scalar_select %p194, %s17, 3
        %p196 = scmp.lt.s32.totalorder %s191, 1
        %s197 = scalar_select %p196, %s191, 1
        %s198 = smul.addr %s195, 2
        %s199 = sadd.s32 %s197, %s198
        %s200 = smul.addr %s193, 8
        %s201 = sadd.s32 %s199, %s200
        %s202 = smul.addr %s201, 8
        %s203 = scalar_lea.vmem %s1, %s202
        %s204 = smul.u32 2, %s19
      $region24: #{any_attention_forward.8} parent=15 // pred_fallthru
        _
      // Predicated region
      $region25: #{any_attention_forward.8} parent=15 // pred_check
        %p205 = pneg %p119
      $region26: #{any_attention_forward.8} parent=15 // pred_check_branch
        %207 = sbr.rel (%p205) target = $region28
      $region27: #{any_attention_forward.8} parent=15 // pred_region
        %s208 = smul.u32 2, %s19
        %p209 = scmp.lt.s32.totalorder %s16, 1
        %s210 = scalar_select %p209, %s16, 1
        %p211 = scmp.lt.s32.totalorder %s17, 3
        %s212 = scalar_select %p211, %s17, 3
        %p213 = scmp.lt.s32.totalorder %s208, 1
        %s214 = scalar_select %p213, %s208, 1
        %s215 = smul.addr %s212, 2
        %s216 = sadd.s32 %s214, %s215
        %s217 = smul.addr %s210, 8
        %s218 = sadd.s32 %s216, %s217
        %s219 = smul.addr %s218, 8
        %s220 = scalar_lea.vmem %s2, %s219
        %s221 = smul.u32 2, %s19
      $region28: #{any_attention_forward.8} parent=15 // pred_fallthru
        _
    $region16: #{any_attention_forward.8} parent=5 // pred_fallthru
      _
    %p222 = scmp.le.s32.totalorder 1, %s9
    %p223 = scmp.lt.s32.totalorder %s9, 9
    %p224 = pnand %p222, %p223
    %p225 = pneg %p224
    // Predicated region
    $region29: #{any_attention_forward.8} parent=5 // pred_check
      _
    $region30: #{any_attention_forward.8} parent=5 // pred_check_branch
      %227 = sbr.rel (%p224) target = $region32
    $region31: #{any_attention_forward.8} parent=5 // pred_region
      %s228 = ssub.s32 %s9, 1
      %p229 = scmp.lt.s32.totalorder %s20, 1
      %s230 = scalar_select %p229, %s20, 1
      %p231 = scmp.lt.s32.totalorder %s21, 3
      %s232 = scalar_select %p231, %s21, 3
      %p233 = scmp.lt.s32.totalorder %s22, 0
      %s234 = scalar_select %p233, %s22, 0
      %s235 = sadd.s32 %s234, %s232
      %s236 = smul.addr %s230, 4
      %s237 = sadd.s32 %s235, %s236
      %s238 = smul.addr %s237, 8
      %s239 = scalar_lea.vmem %s0, %s238
      %p240 = pneg %p65
      %p241 = pneg %p62
      %s242 = smul.u32 2, %s23
      %p243 = scmp.lt.s32.totalorder %s20, 1
      %s244 = scalar_select %p243, %s20, 1
      %p245 = scmp.lt.s32.totalorder %s21, 3
      %s246 = scalar_select %p245, %s21, 3
      %p247 = scmp.lt.s32.totalorder %s242, 1
      %s248 = scalar_select %p247, %s242, 1
      %s249 = smul.addr %s246, 2
      %s250 = sadd.s32 %s248, %s249
      %s251 = smul.addr %s244, 8
      %s252 = sadd.s32 %s250, %s251
      %s253 = smul.addr %s252, 8
      %s254 = scalar_lea.vmem %s1, %s253
      %p255 = pneg %p95
      %p256 = pneg %p92
      %s257 = smul.u32 2, %s23
      %p258 = scmp.lt.s32.totalorder %s20, 1
      %s259 = scalar_select %p258, %s20, 1
      %p260 = scmp.lt.s32.totalorder %s21, 3
      %s261 = scalar_select %p260, %s21, 3
      %p262 = scmp.lt.s32.totalorder %s257, 1
      %s263 = scalar_select %p262, %s257, 1
      %s264 = smul.addr %s261, 2
      %s265 = sadd.s32 %s263, %s264
      %s266 = smul.addr %s259, 8
      %s267 = sadd.s32 %s265, %s266
      %s268 = smul.addr %s267, 8
      %s269 = scalar_lea.vmem %s2, %s268
      %p270 = pneg %p125
      %p271 = pneg %p122
      %p272 = pneg %p155
      %p273 = pneg %p152
      %p274 = scmp.lt.s32.totalorder %s20, 1
      %s275 = scalar_select %p274, %s20, 1
      %p276 = scmp.lt.s32.totalorder %s21, 3
      %s277 = scalar_select %p276, %s21, 3
      %p278 = scmp.lt.s32.totalorder %s22, 0
      %s279 = scalar_select %p278, %s22, 0
      %s280 = sadd.s32 %s279, %s277
      %s281 = smul.addr %s275, 4
      %s282 = sadd.s32 %s280, %s281
      %s283 = smul.addr %s282, 8
      %s284 = scalar_lea.vmem %s3, %s283
      %p285 = scmp.lt.s32.totalorder %s20, 1
      %s286 = scalar_select %p285, %s20, 1
      %p287 = scmp.lt.s32.totalorder %s21, 3
      %s288 = scalar_select %p287, %s21, 3
      %p289 = scmp.lt.s32.totalorder %s22, 0
      %s290 = scalar_select %p289, %s22, 0
      %s291 = sadd.s32 %s290, %s288
      %s292 = smul.addr %s286, 4
      %s293 = sadd.s32 %s291, %s292
      %s294 = smul.addr %s293, 8
      %s295 = scalar_lea.vmem %s0, %s294
      %s296 = smul.u32 2, %s23
      %p297 = scmp.lt.s32.totalorder %s20, 1
      %s298 = scalar_select %p297, %s20, 1
      %p299 = scmp.lt.s32.totalorder %s21, 3
      %s300 = scalar_select %p299, %s21, 3
      %p301 = scmp.lt.s32.totalorder %s296, 1
      %s302 = scalar_select %p301, %s296, 1
      %s303 = smul.addr %s300, 2
      %s304 = sadd.s32 %s302, %s303
      %s305 = smul.addr %s298, 8
      %s306 = sadd.s32 %s304, %s305
      %s307 = smul.addr %s306, 8
      %s308 = scalar_lea.vmem %s1, %s307
      %s309 = smul.u32 2, %s23
      %s310 = smul.u32 2, %s23
      %p311 = scmp.lt.s32.totalorder %s20, 1
      %s312 = scalar_select %p311, %s20, 1
      %p313 = scmp.lt.s32.totalorder %s21, 3
      %s314 = scalar_select %p313, %s21, 3
      %p315 = scmp.lt.s32.totalorder %s310, 1
      %s316 = scalar_select %p315, %s310, 1
      %s317 = smul.addr %s314, 2
      %s318 = sadd.s32 %s316, %s317
      %s319 = smul.addr %s312, 8
      %s320 = sadd.s32 %s318, %s319
      %s321 = smul.addr %s320, 8
      %s322 = scalar_lea.vmem %s2, %s321
      %s323 = smul.u32 2, %s23
      %p324 = scmp.lt.s32.totalorder %s20, 1
      %s325 = scalar_select %p324, %s20, 1
      %p326 = scmp.lt.s32.totalorder %s21, 3
      %s327 = scalar_select %p326, %s21, 3
      %p328 = scmp.lt.s32.totalorder %s22, 0
      %s329 = scalar_select %p328, %s22, 0
      %s330 = sadd.s32 %s329, %s327
      %s331 = smul.addr %s325, 4
      %s332 = sadd.s32 %s330, %s331
      %s333 = smul.addr %s332, 8
      %s334 = scalar_lea.vmem %s3, %s333
      %p335 = scmp.eq.s32.totalorder %s23, 0
      // Predicated region
      $region33: #{any_attention_forward.8} parent=31 // pred_check
        %p336 = pneg %p335
      $region34: #{any_attention_forward.8} parent=31 // pred_check_branch
        %338 = sbr.rel (%p336) target = $region36
      $region35: #{any_attention_forward.8} parent=31 // pred_region
        %339 = vst [vmem:[#allocation2] sm:$0xff] -inf
        %340 = vst [vmem:[#allocation3] sm:$0xff] 0.0
        %vm341 = vcmask 64512
        %342 = vst.msk [vmem:[#allocation4] sm:$0xff] %vm341, 0.0
      $region36: #{any_attention_forward.8} parent=31 // pred_fallthru
        _
      %v343 = vld [vmem:[%s295] sm:$0xff]
      %v344 = vmul.f32 %v343, 0.35355338
      %v345 = vld [vmem:[%s308] sm:$0xff]
      %v346 = vld [vmem:[%s308 + $0x8] sm:$0xff]
      %vm347 = vcmask 64512
      %v349 = vsel %vm347, %v344, 0
      %v352 = vsel %vm347, %v345, 0
      %v355 = vsel %vm347, %v346, 0
      %357 = vmatprep.subr.mxu0 0.0
      %358 = vmatpush1.xpose.msra.mxu0 %v352
      %359 = vmatprep.subr.mxu0 0.0
      %360 = vmatpush1.xpose.msra.mxu0 %v355
      %361 = vmatprep.subr.mxu0 0.0
      %362 = vmatpush1.xpose.msra.mxu0 0.0
      %363 = vmatprep.subr.mxu0 0.0
      %364 = vmatpush1.xpose.msra.mxu0 0.0
      %365 = vmatprep.subr.mxu0 0.0
      %366 = vmatpush1.xpose.msra.mxu0 0.0
      %367 = vmatprep.subr.mxu0 0.0
      %368 = vmatpush1.xpose.msra.mxu0 0.0
      %369 = vmatprep.subr.mxu0 0.0
      %370 = vmatpush1.xpose.msra.mxu0 0.0
      %371 = vmatprep.subr.mxu0 0.0
      %372 = vmatpush1.xpose.msra.mxu0 0.0
      %373 = vmatprep.subr.mxu0 0.0
      %374 = vmatpush1.xpose.msra.mxu0 0.0
      %375 = vmatprep.subr.mxu0 0.0
      %376 = vmatpush1.xpose.msra.mxu0 0.0
      %377 = vmatprep.subr.mxu0 0.0
      %378 = vmatpush1.xpose.msra.mxu0 0.0
      %379 = vmatprep.subr.mxu0 0.0
      %380 = vmatpush1.xpose.msra.mxu0 0.0
      %381 = vmatprep.subr.mxu0 0.0
      %382 = vmatpush1.xpose.msra.mxu0 0.0
      %383 = vmatprep.subr.mxu0 0.0
      %384 = vmatpush1.xpose.msra.mxu0 0.0
      %385 = vmatprep.subr.mxu0 0.0
      %386 = vmatpush1.xpose.msra.mxu0 0.0
      %387 = vmatprep.subr.mxu0 0.0
      %388 = vmatpush1.xpose.msra.mxu0 0.0
      %389 = vmatprep.subr.mxu0 0.0
      %390 = vmatpush1.xpose.msra.mxu0 0.0
      %391 = vmatprep.subr.mxu0 0.0
      %392 = vmatpush1.xpose.msra.mxu0 0.0
      %393 = vmatprep.subr.mxu0 0.0
      %394 = vmatpush1.xpose.msra.mxu0 0.0
      %395 = vmatprep.subr.mxu0 0.0
      %396 = vmatpush1.xpose.msra.mxu0 0.0
      %397 = vmatprep.subr.mxu0 0.0
      %398 = vmatpush1.xpose.msra.mxu0 0.0
      %399 = vmatprep.subr.mxu0 0.0
      %400 = vmatpush1.xpose.msra.mxu0 0.0
      %401 = vmatprep.subr.mxu0 0.0
      %402 = vmatpush1.xpose.msra.mxu0 0.0
      %403 = vmatprep.subr.mxu0 0.0
      %404 = vmatpush1.xpose.msra.mxu0 0.0
      %405 = vmatprep.subr.mxu0 0.0
      %406 = vmatpush1.xpose.msra.mxu0 0.0
      %407 = vmatprep.subr.mxu0 0.0
      %408 = vmatpush1.xpose.msra.mxu0 0.0
      %409 = vmatprep.subr.mxu0 0.0
      %410 = vmatpush1.xpose.msra.mxu0 0.0
      %411 = vmatprep.subr.mxu0 0.0
      %412 = vmatpush1.xpose.msra.mxu0 0.0
      %413 = vmatprep.subr.mxu0 0.0
      %414 = vmatpush1.xpose.msra.mxu0 0.0
      %415 = vmatprep.subr.mxu0 0.0
      %416 = vmatpush1.xpose.msra.mxu0 0.0
      %417 = vmatprep.subr.mxu0 0.0
      %418 = vmatpush1.xpose.msra.mxu0 0.0
      %419 = vmatprep.subr.mxu0 0.0
      %420 = vmatpush1.xpose.msra.mxu0 0.0
      %421 = vmatprep.mubr.f32.mxu0 0.0
      %422 = vmatmul.mubr.f32.gmra.mrb[0].mxu0 %v349
      %v423 = vpop.f32.mrb[0].mxu0
      %v424 = vadd.f32 0.0, %v423
      %v425 = vpop.f32.mrb[0].mxu0
      %426 = vdwg.mxu0
      %v427 = vld [vmem:[#allocation2] sm:$0xff]
      %428 = vmax.xlane.f32.xlu0 %v427
      %v429 = vpop.xlane.xlu0 %428
      %vm430 = vcmask 130048
      %v431 = vsel %vm430, %v424, -inf
      %432 = vmax.xlane.f32.xlu0 %v431
      %v433 = vpop.xlane.xlu0 %432
      %v434 = vmax.f32 %v429, %v433
      %v435 = vsub.f32 %v429, %v434
      %v436 = vmul.f32 %v435, 1.442695
      %v437 = vpow.pop %v436
      %v438 = vsub.f32 %v424, %v434
      %v439 = vmul.f32 %v438, 1.442695
      %v440 = vpow.pop %v439
      %v441 = vld [vmem:[#allocation3] sm:$0xff]
      %v442 = vmul.f32 %v437, %v441
      %v443 = vsel %vm430, %v440, 0.0
      %444 = vadd.xlane.f32.xlu0 %v443
      %v445 = vpop.xlane.xlu0 %444
      %v446 = vadd.f32 %v442, %v445
      %447 = vst [vmem:[#allocation3] sm:$0xff] %v446
      %v448 = vld [vmem:[#allocation4] sm:$0xff]
      %v449 = vmul.f32 %v437, %v448
      %v450 = vld [vmem:[%s322] sm:$0xff]
      %v451 = vld [vmem:[%s322 + $0x8] sm:$0xff]
      %v453 = vsel %vm430, %v440, 0
      %455 = vmatprep.subr.mxu0 0.0
      %456 = vmatpush1.msra.mxu0 %v450
      %457 = vmatprep.subr.mxu0 0.0
      %458 = vmatpush1.msra.mxu0 %v451
      %459 = vmatprep.subr.mxu0 0.0
      %460 = vmatpush1.msra.mxu0 0.0
      %461 = vmatprep.subr.mxu0 0.0
      %462 = vmatpush1.msra.mxu0 0.0
      %463 = vmatprep.subr.mxu0 0.0
      %464 = vmatpush1.msra.mxu0 0.0
      %465 = vmatprep.subr.mxu0 0.0
      %466 = vmatpush1.msra.mxu0 0.0
      %467 = vmatprep.subr.mxu0 0.0
      %468 = vmatpush1.msra.mxu0 0.0
      %469 = vmatprep.subr.mxu0 0.0
      %470 = vmatpush1.msra.mxu0 0.0
      %471 = vmatprep.subr.mxu0 0.0
      %472 = vmatpush1.msra.mxu0 0.0
      %473 = vmatprep.subr.mxu0 0.0
      %474 = vmatpush1.msra.mxu0 0.0
      %475 = vmatprep.subr.mxu0 0.0
      %476 = vmatpush1.msra.mxu0 0.0
      %477 = vmatprep.subr.mxu0 0.0
      %478 = vmatpush1.msra.mxu0 0.0
      %479 = vmatprep.subr.mxu0 0.0
      %480 = vmatpush1.msra.mxu0 0.0
      %481 = vmatprep.subr.mxu0 0.0
      %482 = vmatpush1.msra.mxu0 0.0
      %483 = vmatprep.subr.mxu0 0.0
      %484 = vmatpush1.msra.mxu0 0.0
      %485 = vmatprep.subr.mxu0 0.0
      %486 = vmatpush1.msra.mxu0 0.0
      %487 = vmatprep.subr.mxu0 0.0
      %488 = vmatpush1.msra.mxu0 0.0
      %489 = vmatprep.subr.mxu0 0.0
      %490 = vmatpush1.msra.mxu0 0.0
      %491 = vmatprep.subr.mxu0 0.0
      %492 = vmatpush1.msra.mxu0 0.0
      %493 = vmatprep.subr.mxu0 0.0
      %494 = vmatpush1.msra.mxu0 0.0
      %495 = vmatprep.subr.mxu0 0.0
      %496 = vmatpush1.msra.mxu0 0.0
      %497 = vmatprep.subr.mxu0 0.0
      %498 = vmatpush1.msra.mxu0 0.0
      %499 = vmatprep.subr.mxu0 0.0
      %500 = vmatpush1.msra.mxu0 0.0
      %501 = vmatprep.subr.mxu0 0.0
      %502 = vmatpush1.msra.mxu0 0.0
      %503 = vmatprep.subr.mxu0 0.0
      %504 = vmatpush1.msra.mxu0 0.0
      %505 = vmatprep.subr.mxu0 0.0
      %506 = vmatpush1.msra.mxu0 0.0
      %507 = vmatprep.subr.mxu0 0.0
      %508 = vmatpush1.msra.mxu0 0.0
      %509 = vmatprep.subr.mxu0 0.0
      %510 = vmatpush1.msra.mxu0 0.0
      %511 = vmatprep.subr.mxu0 0.0
      %512 = vmatpush1.msra.mxu0 0.0
      %513 = vmatprep.subr.mxu0 0.0
      %514 = vmatpush1.msra.mxu0 0.0
      %515 = vmatprep.subr.mxu0 0.0
      %516 = vmatpush1.msra.mxu0 0.0
      %517 = vmatprep.subr.mxu0 0.0
      %518 = vmatpush1.msra.mxu0 0.0
      %519 = vmatprep.mubr.f32.mxu0 0.0
      %520 = vmatmul.mubr.f32.gmra.mrb[0].mxu0 %v453
      %v521 = vpop.f32.mrb[0].mxu0
      %v522 = vadd.f32 0.0, %v521
      %v523 = vpop.f32.mrb[0].mxu0
      %524 = vdwg.mxu0
      %v525 = vadd.f32 %v449, %v522
      %526 = vst.msk [vmem:[#allocation4] sm:$0xff] %vm347, %v525
      %527 = vst [vmem:[#allocation2] sm:$0xff] %v434
      // Predicated region
      $region37: #{any_attention_forward.8} parent=31 // pred_check
        %p528 = pneg %p335
      $region38: #{any_attention_forward.8} parent=31 // pred_check_branch
        %530 = sbr.rel (%p528) target = $region40
      $region39: #{any_attention_forward.8} parent=31 // pred_region
        %v531 = vld [vmem:[#allocation3] sm:$0xff]
        %532 = vmax.xlane.f32.xlu0 %v531
        %v533 = vpop.xlane.xlu0 %532
        %v534 = vld [vmem:[#allocation4] sm:$0xff]
        %v535 = vrcp.pop %v533
        %v536 = vmul.f32 %v534, %v535
        %537 = vst.msk [vmem:[%s334] sm:$0xff] %vm347, %v536
      $region40: #{any_attention_forward.8} parent=31 // pred_fallthru
        _
      %p538 = scmp.lt.s32.totalorder %s20, 1
      %s539 = scalar_select %p538, %s20, 1
      %p540 = scmp.lt.s32.totalorder %s21, 3
      %s541 = scalar_select %p540, %s21, 3
      %p542 = scmp.lt.s32.totalorder %s22, 0
      %s543 = scalar_select %p542, %s22, 0
      %s544 = sadd.s32 %s543, %s541
      %s545 = smul.addr %s539, 4
      %s546 = sadd.s32 %s544, %s545
      %s547 = smul.addr %s546, 8
      %s548 = scalar_lea.vmem %s3, %s547
      // Predicated region
      $region41: #{any_attention_forward.8} parent=31 // pred_check
        %p549 = pneg %p152
      $region42: #{any_attention_forward.8} parent=31 // pred_check_branch
        %551 = sbr.rel (%p549) target = $region44
      $region43: #{any_attention_forward.8} parent=31 // pred_region
        _
      $region44: #{any_attention_forward.8} parent=31 // pred_fallthru
        _
    $region32: #{any_attention_forward.8} parent=5 // pred_fallthru
      _
    %p552 = scmp.le.s32.totalorder 2, %s9
    // Predicated region
    $region45: #{any_attention_forward.8} parent=5 // pred_check
      %p553 = pneg %p552
    $region46: #{any_attention_forward.8} parent=5 // pred_check_branch
      %555 = sbr.rel (%p553) target = $region48
    $region47: #{any_attention_forward.8} parent=5 // pred_region
      %s556 = ssub.s32 %s9, 2
      // Predicated region
      $region49: #{any_attention_forward.8} parent=47 // pred_check
        %p557 = pneg %p158
      $region50: #{any_attention_forward.8} parent=47 // pred_check_branch
        %559 = sbr.rel (%p557) target = $region52
      $region51: #{any_attention_forward.8} parent=47 // pred_region
        %p560 = scmp.lt.s32.totalorder %s24, 1
        %s561 = scalar_select %p560, %s24, 1
        %p562 = scmp.lt.s32.totalorder %s25, 3
        %s563 = scalar_select %p562, %s25, 3
        %p564 = scmp.lt.s32.totalorder %s26, 0
        %s565 = scalar_select %p564, %s26, 0
        %s566 = sadd.s32 %s565, %s563
        %s567 = smul.addr %s561, 4
        %s568 = sadd.s32 %s566, %s567
        %s569 = smul.addr %s568, 8
        %s570 = scalar_lea.vmem %s3, %s569
      $region52: #{any_attention_forward.8} parent=47 // pred_fallthru
        _
    $region48: #{any_attention_forward.8} parent=5 // pred_fallthru
      _
  $region6: #{any_attention_forward.8} parent=0 // loop_footer
    %s13 = sadd.s32 1, %s9
  $region7: #{any_attention_forward.8} parent=0 // loop_footer_branch
    %8 = sbr.rel target = $region3
  $region8: #{any_attention_forward.8} parent=0 // loop_exit
    _

// kernel: any_attention_forward.9
$region0: #{any_attention_forward.9}
  #allocation0 [shape = 'u32[]', space=smem, size = 0x4, offset = 0x4, fixed_abs, tag = 'smem constant byte address 0x4 - core index']
  #allocation1 [shape = 'u32[144,128]{1,0:T(1,128)}', space=vmem, size = 0x12000, scoped, tag = 'internal scratch']
  %s0 = inlined_call_operand.vmem [shape: f32[16,32], index: 0, kind: input, shape index: {}]
  %s1 = inlined_call_operand.vmem [shape: f32[32,32], index: 1, kind: input, shape index: {}]
  %s2 = inlined_call_operand.vmem [shape: f32[1,32], index: 2, kind: input, shape index: {}]
  %s3 = inlined_call_operand.hbm [shape: f32[16,32], index: 3, kind: output, shape index: {}]
  %s4 = sld [smem:[#allocation0]]
  $region22: #{any_attention_forward.9} parent=0
    _
  %s6 = ssub.s32 1, %s4
  %s7 = scalar_select 0, %s6, %s4
  $region1: #{any_attention_forward.9} parent=0
    #allocation2 [shape = 'u8[8192]{0}', space=vmem, size = 0x2000, scoped, tag = 'output window, operand 0, single buffered']
    #allocation3 [shape = 's32[1]{0}', space=sflag, size = 0x4, scoped, tag = 'scoped memory for any_attention_forward.9']
    %8 = vsyncpa [#allocation3], 0
    // Predicated region
    $region2: #{any_attention_forward.9} parent=1 // pred_check
      _
    $region3: #{any_attention_forward.9} parent=1 // pred_check_branch
      %10 = sbr.rel (0) target = $region5
    $region4: #{any_attention_forward.9} parent=1 // pred_region
      _
    $region5: #{any_attention_forward.9} parent=1 // pred_fallthru
      _
    // Predicated region
    $region6: #{any_attention_forward.9} parent=1 // pred_check
      _
    $region7: #{any_attention_forward.9} parent=1 // pred_check_branch
      %12 = sbr.rel (0) target = $region9
    $region8: #{any_attention_forward.9} parent=1 // pred_region
      _
    $region9: #{any_attention_forward.9} parent=1 // pred_fallthru
      _
    // Predicated region
    $region10: #{any_attention_forward.9} parent=1 // pred_check
      _
    $region11: #{any_attention_forward.9} parent=1 // pred_check_branch
      %14 = sbr.rel (0) target = $region13
    $region12: #{any_attention_forward.9} parent=1 // pred_region
      _
    $region13: #{any_attention_forward.9} parent=1 // pred_fallthru
      _
    %v15 = vld [vmem:[%s0] sm:$0xff]
    %v16 = vld [vmem:[%s0 + $0x8] sm:$0xff]
    %v17 = vld [vmem:[%s1] sm:$0xff]
    %v18 = vld [vmem:[%s1 + $0x8] sm:$0xff]
    %v19 = vld [vmem:[%s1 + $0x10] sm:$0xff]
    %v20 = vld [vmem:[%s1 + $0x18] sm:$0xff]
    %v21 = vld [vmem:[%s2] sm:$0x1]
    %v23 = vlaneseq
    %v24 = vshrl.u32 %v23, 7
    %v25 = vsub.s32 0, %v24
    %v26 = vrot.slane %v21, %v25
    %vm28 = vcmask 261120
    %v30 = vsel %vm28, %v15, 0
    %v33 = vsel %vm28, %v16, 0
    %35 = vmatprep.subr.mxu0 0.0
    %36 = vmatpush1.msra.mxu0 %v17
    %37 = vmatprep.subr.mxu0 0.0
    %38 = vmatpush1.msra.mxu0 %v18
    %39 = vmatprep.subr.mxu0 0.0
    %40 = vmatpush1.msra.mxu0 %v19
    %41 = vmatprep.subr.mxu0 0.0
    %42 = vmatpush1.msra.mxu0 %v20
    %43 = vmatprep.subr.mxu0 0.0
    %44 = vmatpush1.msra.mxu0 0.0
    %45 = vmatprep.subr.mxu0 0.0
    %46 = vmatpush1.msra.mxu0 0.0
    %47 = vmatprep.subr.mxu0 0.0
    %48 = vmatpush1.msra.mxu0 0.0
    %49 = vmatprep.subr.mxu0 0.0
    %50 = vmatpush1.msra.mxu0 0.0
    %51 = vmatprep.subr.mxu0 0.0
    %52 = vmatpush1.msra.mxu0 0.0
    %53 = vmatprep.subr.mxu0 0.0
    %54 = vmatpush1.msra.mxu0 0.0
    %55 = vmatprep.subr.mxu0 0.0
    %56 = vmatpush1.msra.mxu0 0.0
    %57 = vmatprep.subr.mxu0 0.0
    %58 = vmatpush1.msra.mxu0 0.0
    %59 = vmatprep.subr.mxu0 0.0
    %60 = vmatpush1.msra.mxu0 0.0
    %61 = vmatprep.subr.mxu0 0.0
    %62 = vmatpush1.msra.mxu0 0.0
    %63 = vmatprep.subr.mxu0 0.0
    %64 = vmatpush1.msra.mxu0 0.0
    %65 = vmatprep.subr.mxu0 0.0
    %66 = vmatpush1.msra.mxu0 0.0
    %67 = vmatprep.subr.mxu0 0.0
    %68 = vmatpush1.msra.mxu0 0.0
    %69 = vmatprep.subr.mxu0 0.0
    %70 = vmatpush1.msra.mxu0 0.0
    %71 = vmatprep.subr.mxu0 0.0
    %72 = vmatpush1.msra.mxu0 0.0
    %73 = vmatprep.subr.mxu0 0.0
    %74 = vmatpush1.msra.mxu0 0.0
    %75 = vmatprep.subr.mxu0 0.0
    %76 = vmatpush1.msra.mxu0 0.0
    %77 = vmatprep.subr.mxu0 0.0
    %78 = vmatpush1.msra.mxu0 0.0
    %79 = vmatprep.subr.mxu0 0.0
    %80 = vmatpush1.msra.mxu0 0.0
    %81 = vmatprep.subr.mxu0 0.0
    %82 = vmatpush1.msra.mxu0 0.0
    %83 = vmatprep.subr.mxu0 0.0
    %84 = vmatpush1.msra.mxu0 0.0
    %85 = vmatprep.subr.mxu0 0.0
    %86 = vmatpush1.msra.mxu0 0.0
    %87 = vmatprep.subr.mxu0 0.0
    %88 = vmatpush1.msra.mxu0 0.0
    %89 = vmatprep.subr.mxu0 0.0
    %90 = vmatpush1.msra.mxu0 0.0
    %91 = vmatprep.subr.mxu0 0.0
    %92 = vmatpush1.msra.mxu0 0.0
    %93 = vmatprep.subr.mxu0 0.0
    %94 = vmatpush1.msra.mxu0 0.0
    %95 = vmatprep.subr.mxu0 0.0
    %96 = vmatpush1.msra.mxu0 0.0
    %97 = vmatprep.subr.mxu0 0.0
    %98 = vmatpush1.msra.mxu0 0.0
    %99 = vmatprep.mubr.f32.mxu0 0.0
    %100 = vmatmul.mubr.f32.gmra.mrb[0].mxu0 %v30
    %v101 = vpop.f32.mrb[0].mxu0
    %v102 = vadd.f32 %v26, %v101
    %v103 = vpop.f32.mrb[0].mxu0
    %104 = vmatprep.mubr.f32.mxu0 0.0
    %105 = vmatmul.mubr.f32.gmra.mrb[0].mxu0 %v33
    %v106 = vpop.f32.mrb[0].mxu0
    %v107 = vadd.f32 %v26, %v106
    %v108 = vpop.f32.mrb[0].mxu0
    %109 = vdwg.mxu0
    %110 = vst.msk [vmem:[#allocation2] sm:$0xff] %vm28, %v102
    %111 = vst.msk [vmem:[#allocation2 + $0x8] sm:$0xff] %vm28, %v107
    // Predicated region
    $region14: #{any_attention_forward.9} parent=1 // pred_check
      _
    $region15: #{any_attention_forward.9} parent=1 // pred_check_branch
      %113 = sbr.rel (0) target = $region17
    $region16: #{any_attention_forward.9} parent=1 // pred_region
      %s115 = ssub.s32 256, 256
      %116 = vsyncadd [#allocation3], %s115
      %s117 = sshll.u32 [#allocation2], 4
      %s118 = int_to_ptr.vmem [resolvable:$true] %s117
      %123 = dma.vmem_to_hbm [thread:$0]  %s118, 256, %s3, [#allocation3], 128, 128, 8
    $region17: #{any_attention_forward.9} parent=1 // pred_fallthru
      _
    // Predicated region
    $region18: #{any_attention_forward.9} parent=1 // pred_check
      _
    $region19: #{any_attention_forward.9} parent=1 // pred_check_branch
      %125 = sbr.rel (0) target = $region21
    $region20: #{any_attention_forward.9} parent=1 // pred_region
      %126 = dma.done [#allocation3], 256
    $region21: #{any_attention_forward.9} parent=1 // pred_fallthru
      _
    %127 = vsyncpa [#allocation3], 1

</llo_original>
